<compile_context>
chip_gen: v6e
topology: v6e:2x2x1
jax: 0.10.0
libtpu: 0.0.40
codegen_flags: <defaults>
</compile_context>

<pallas_src>
import jax
import jax.numpy as jnp
from jax.experimental import pallas as pl
from jax.experimental.pallas import tpu as pltpu


IN_DIM = 30      # logical fc3 input: 20 latent + 10 one-hot
IN_PAD = 32      # zero-padded K for aligned loads
HID_DIM = 400
OUT_DIM = 784    # fc4 output (torch.narrow keeps 0:784) — written directly


# ----------------------------------------------------------------------------
# Pallas kernel: one batch tile per grid step; weights resident in VMEM.
# ----------------------------------------------------------------------------
def aux_decode_kernel(x_ref, w3_ref, b3_ref, w4_ref, b4_ref, o_ref):
    # fc3 + ReLU  (bf16 MXU inputs, f32 accumulation)
    x = x_ref[...].astype(jnp.bfloat16)                           # (TB, 32)
    h = jnp.dot(x, w3_ref[...], preferred_element_type=jnp.float32)
    h = jnp.maximum(h + b3_ref[...], 0.0)                         # (TB, 400) f32
    # fc4 + Sigmoid
    out = jnp.dot(h.astype(jnp.bfloat16), w4_ref[...],
                  preferred_element_type=jnp.float32)             # (TB, 784)
    out = out + b4_ref[...]
    # sigmoid(x) = 0.5 * (tanh(0.5 * x) + 1): one EUP op instead of exp + div.
    o_ref[...] = (0.5 * (jnp.tanh(0.5 * out) + 1.0)).astype(o_ref.dtype)


def aux_decode_pallas(cat_padded, w3, b3, w4, b4, tb):
    """cat_padded: (Bp, 32) f32 with Bp % tb == 0. Returns (Bp, 784) bf16."""
    Bp, K = cat_padded.shape
    H = w3.shape[1]
    N = w4.shape[1]
    n_steps = Bp // tb

    flops = 2 * Bp * (K * H + H * N)
    transcendentals = Bp * N
    bytes_accessed = (Bp * K * 4                       # f32 input slab
                      + (w3.size + w4.size) * 2        # bf16 weights
                      + (b3.size + b4.size) * 4        # f32 biases
                      + Bp * N * 2)                    # bf16 output

    return pl.pallas_call(
        aux_decode_kernel,
        out_shape=jax.ShapeDtypeStruct((Bp, N), jnp.bfloat16),
        grid=(n_steps,),
        in_specs=[
            pl.BlockSpec((tb, K), lambda i: (i, 0)),       # activations: tiled
            pl.BlockSpec(w3.shape, lambda i: (0, 0)),      # weights/biases:
            pl.BlockSpec(b3.shape, lambda i: (0, 0)),      #   VMEM-resident
            pl.BlockSpec(w4.shape, lambda i: (0, 0)),      #   (constant index)
            pl.BlockSpec(b4.shape, lambda i: (0, 0)),
        ],
        out_specs=pl.BlockSpec((tb, N), lambda i: (i, 0)),
        compiler_params=pltpu.CompilerParams(
            dimension_semantics=("parallel",),             # megacore on v7x
            vmem_limit_bytes=32 * 1024 * 1024),
        cost_estimate=pl.CostEstimate(
            flops=flops,
            transcendentals=transcendentals,
            bytes_accessed=bytes_accessed),
    )(cat_padded, w3, b3, w4, b4)


# ----------------------------------------------------------------------------
# Glue (plain JAX): one-hot encoding, param init / packing, wrapper.
# ----------------------------------------------------------------------------
# TODO(synk): idx2onehot is not defined in vaeGAN/vaegan.py; approximated here
# as an alpha-blend of one-hot(y) and one-hot(label) over 10 classes.
def idx2onehot(y, n, label=None, alpha=1.0):
    oh = jax.nn.one_hot(y, n, dtype=jnp.float32)
    if label is not None:
        oh_label = jax.nn.one_hot(label, n, dtype=jnp.float32)
        oh = alpha * oh + (1.0 - alpha) * oh_label
    return oh


def init_aux_params(key):
    """nn.Linear(30, 400), nn.Linear(400, 784) init; weights stored (in, out)."""
    k1, k2, k3, k4 = jax.random.split(key, 4)
    lim3 = 1.0 / jnp.sqrt(30.0)
    lim4 = 1.0 / jnp.sqrt(400.0)
    w3 = jax.random.uniform(k1, (IN_DIM, HID_DIM), jnp.float32, -lim3, lim3)
    b3 = jax.random.uniform(k2, (1, HID_DIM), jnp.float32, -lim3, lim3)
    w4 = jax.random.uniform(k3, (HID_DIM, OUT_DIM), jnp.float32, -lim4, lim4)
    b4 = jax.random.uniform(k4, (1, OUT_DIM), jnp.float32, -lim4, lim4)
    return w3, b3, w4, b4


def pack_aux_params(params):
    """One-time pad + cast for the kernel:
       w3: (30,400)  -> (32,400) bf16, zero rows appended (K pad)
       w4: (400,784) ->           bf16 (no column pad: output written at 784)
       b3, b4 stay f32.
    """
    w3, b3, w4, b4 = params
    w3p = jnp.zeros((IN_PAD, HID_DIM), jnp.float32).at[:IN_DIM, :].set(w3)
    return (w3p.astype(jnp.bfloat16), b3, w4.astype(jnp.bfloat16), b4)


def _round_up(x, m):
    return (x + m - 1) // m * m


def _choose_tiling(B, tb_max=1024, min_steps=2):
    """Pick (tb, Bp): tb multiple of 8, batch pad < 8 rows, and >= 2 grid
    steps whenever B allows (so the "parallel" axis shards across v7x's 2 TCs)."""
    B8 = _round_up(B, 8)
    max_steps = B8 // 8
    n_steps = max(pl.cdiv(B8, tb_max), min(min_steps, max_steps), 1)
    tb = _round_up(pl.cdiv(B8, n_steps), 8)
    Bp = tb * pl.cdiv(B8, tb)
    return tb, Bp


def aux_forward(packed_params, z, y, label=None, alpha=1.0, tb_max=1024):
    """Matches Aux.forward: decode(z, y, label, alpha) -> (B, 784) in [0, 1].

    Output dtype is bfloat16 (kernel writes bf16 to halve HBM writeback);
    cast to f32 downstream if needed."""
    w3, b3, w4, b4 = packed_params
    z = z.reshape(-1, 20)                                 # z.view(-1, 20)
    y_c = idx2onehot(y, 10, label, alpha)                 # (B, 10)
    B = z.shape[0]

    tb, Bp = _choose_tiling(B, tb_max)

    # Build the zero-padded (Bp, 32) input slab directly (concat + K pad).
    cat = jnp.zeros((Bp, IN_PAD), jnp.float32)
    cat = cat.at[:B, 0:20].set(z).at[:B, 20:30].set(y_c)

    out = aux_decode_pallas(cat, w3, b3, w4, b4, tb)      # (Bp, 784) bf16
    if Bp != B:                                           # drop < 8 pad rows
        out = out[:B]
    return out


# ----------------------------------------------------------------------------
if __name__ == "__main__":
    key = jax.random.PRNGKey(0)
    k_param, k_z, k_y = jax.random.split(key, 3)

    params = init_aux_params(k_param)
    packed = pack_aux_params(params)

    B = 32   # -> tb=16, grid=(2,): exercises multi-step (megacore) path, no padding
    z = jax.random.normal(k_z, (B, 20), dtype=jnp.float32)
    y = jax.random.randint(k_y, (B,), 0, 10, dtype=jnp.int32)

    out = aux_forward(packed, z, y, label=None, alpha=1.0)
    out = jax.block_until_ready(out)

    assert out.shape == (B, 784), out.shape
    assert out.dtype == jnp.bfloat16, out.dtype
    outf = out.astype(jnp.float32)
    assert bool(jnp.all((outf >= 0.0) & (outf <= 1.0)))

    # Cross-check against a pure-JAX f32 reference of the original math.
    w3, b3, w4, b4 = params
    cat_ref = jnp.concatenate(
        [z, jax.nn.one_hot(y, 10, dtype=jnp.float32)], axis=-1)
    h_ref = jnp.maximum(cat_ref @ w3 + b3, 0.0)
    ref = jax.nn.sigmoid(h_ref @ w4 + b4)
    err = float(jnp.max(jnp.abs(outf - ref)))
    assert err < 3e-2, err

    print("KERNEL_OK")
</pallas_src>

<mosaic_0001>
module attributes {stable_mosaic.version = 11 : i64} {
  func.func @aux_decode_kernel(%arg0: i32, %arg1: memref<16x32xf32, #tpu.memory_space<vmem>>, %arg2: memref<32x400xbf16, #tpu.memory_space<vmem>>, %arg3: memref<1x400xf32, #tpu.memory_space<vmem>>, %arg4: memref<400x784xbf16, #tpu.memory_space<vmem>>, %arg5: memref<1x784xf32, #tpu.memory_space<vmem>>, %arg6: memref<16x784xbf16, #tpu.memory_space<vmem>>) attributes {dimension_semantics = [#tpu.dimension_semantics<parallel>], iteration_bounds = array<i64: 2>, scalar_prefetch = 0 : i64, scratch_operands = 0 : i64, tpu.core_type = #tpu.core_type<tc>, window_params = [{transform_indices = @transform_0, window_bounds = array<i64: 16, 32>}, {pipeline_mode = #tpu.pipeline_mode<synchronous>, transform_indices = @transform_1, window_bounds = array<i64: 32, 400>}, {pipeline_mode = #tpu.pipeline_mode<synchronous>, transform_indices = @transform_2, window_bounds = array<i64: 1, 400>}, {pipeline_mode = #tpu.pipeline_mode<synchronous>, transform_indices = @transform_3, window_bounds = array<i64: 400, 784>}, {pipeline_mode = #tpu.pipeline_mode<synchronous>, transform_indices = @transform_4, window_bounds = array<i64: 1, 784>}, {transform_indices = @transform_5, window_bounds = array<i64: 16, 784>}]} {
    %c0 = arith.constant 0 : index
    %c0_0 = arith.constant 0 : index
    %0 = vector.load %arg1[%c0, %c0_0] : memref<16x32xf32, #tpu.memory_space<vmem>>, vector<16x32xf32>
    %1 = arith.truncf %0 : vector<16x32xf32> to vector<16x32xbf16>
    %c0_1 = arith.constant 0 : index
    %c0_2 = arith.constant 0 : index
    %2 = vector.load %arg2[%c0_1, %c0_2] : memref<32x400xbf16, #tpu.memory_space<vmem>>, vector<32x400xbf16>
    %cst = arith.constant dense<0.000000e+00> : vector<16x400xf32>
    %3 = tpu.matmul %1, %2, %cst {dimension_numbers = #tpu.dot_dimension_numbers<[1], [0], [0], [1], [0, 0, 1, 1], [], []>} : vector<16x32xbf16>, vector<32x400xbf16>, vector<16x400xf32> -> vector<16x400xf32>
    %c0_3 = arith.constant 0 : index
    %c0_4 = arith.constant 0 : index
    %4 = vector.load %arg3[%c0_3, %c0_4] : memref<1x400xf32, #tpu.memory_space<vmem>>, vector<1x400xf32>
    %5 = vector.broadcast %4 : vector<1x400xf32> to vector<16x400xf32>
    %6 = arith.addf %3, %5 : vector<16x400xf32>
    %cst_5 = arith.constant 0.000000e+00 : f32
    %7 = vector.broadcast %cst_5 : f32 to vector<16x400xf32>
    %8 = arith.maximumf %6, %7 : vector<16x400xf32>
    %9 = arith.truncf %8 : vector<16x400xf32> to vector<16x400xbf16>
    %c0_6 = arith.constant 0 : index
    %c0_7 = arith.constant 0 : index
    %10 = vector.load %arg4[%c0_6, %c0_7] : memref<400x784xbf16, #tpu.memory_space<vmem>>, vector<400x784xbf16>
    %cst_8 = arith.constant dense<0.000000e+00> : vector<16x784xf32>
    %11 = tpu.matmul %9, %10, %cst_8 {dimension_numbers = #tpu.dot_dimension_numbers<[1], [0], [0], [1], [0, 0, 1, 1], [], []>} : vector<16x400xbf16>, vector<400x784xbf16>, vector<16x784xf32> -> vector<16x784xf32>
    %c0_9 = arith.constant 0 : index
    %c0_10 = arith.constant 0 : index
    %12 = vector.load %arg5[%c0_9, %c0_10] : memref<1x784xf32, #tpu.memory_space<vmem>>, vector<1x784xf32>
    %13 = vector.broadcast %12 : vector<1x784xf32> to vector<16x784xf32>
    %14 = arith.addf %11, %13 : vector<16x784xf32>
    %cst_11 = arith.constant 5.000000e-01 : f32
    %15 = vector.broadcast %cst_11 : f32 to vector<16x784xf32>
    %16 = arith.mulf %15, %14 : vector<16x784xf32>
    %17 = math.tanh %16 : vector<16x784xf32>
    %cst_12 = arith.constant 1.000000e+00 : f32
    %18 = vector.broadcast %cst_12 : f32 to vector<16x784xf32>
    %19 = arith.addf %17, %18 : vector<16x784xf32>
    %cst_13 = arith.constant 5.000000e-01 : f32
    %20 = vector.broadcast %cst_13 : f32 to vector<16x784xf32>
    %21 = arith.mulf %20, %19 : vector<16x784xf32>
    %22 = arith.truncf %21 : vector<16x784xf32> to vector<16x784xbf16>
    %c0_14 = arith.constant 0 : index
    %c0_15 = arith.constant 0 : index
    %23 = vector.load %arg6[%c0_14, %c0_15] : memref<16x784xbf16, #tpu.memory_space<vmem>>, vector<16x784xbf16>
    tpu.vector_store %arg6[%c0_14, %c0_15], %22 {strides = array<i32>} : memref<16x784xbf16, #tpu.memory_space<vmem>>, vector<16x784xbf16>,
    return
  }
  func.func @transform_0(%arg0: i32) -> (i32, i32) {
    %c0_i32 = arith.constant 0 : i32
    %c0_i32_0 = arith.constant 0 : i32
    return %arg0, %c0_i32 : i32, i32
  }
  func.func @transform_1(%arg0: i32) -> (i32, i32) {
    %c0_i32 = arith.constant 0 : i32
    %c0_i32_0 = arith.constant 0 : i32
    %c0_i32_1 = arith.constant 0 : i32
    return %c0_i32, %c0_i32_0 : i32, i32
  }
  func.func @transform_2(%arg0: i32) -> (i32, i32) {
    %c0_i32 = arith.constant 0 : i32
    %c0_i32_0 = arith.constant 0 : i32
    %c0_i32_1 = arith.constant 0 : i32
    return %c0_i32, %c0_i32_0 : i32, i32
  }
  func.func @transform_3(%arg0: i32) -> (i32, i32) {
    %c0_i32 = arith.constant 0 : i32
    %c0_i32_0 = arith.constant 0 : i32
    %c0_i32_1 = arith.constant 0 : i32
    return %c0_i32, %c0_i32_0 : i32, i32
  }
  func.func @transform_4(%arg0: i32) -> (i32, i32) {
    %c0_i32 = arith.constant 0 : i32
    %c0_i32_0 = arith.constant 0 : i32
    %c0_i32_1 = arith.constant 0 : i32
    return %c0_i32, %c0_i32_0 : i32, i32
  }
  func.func @transform_5(%arg0: i32) -> (i32, i32) {
    %c0_i32 = arith.constant 0 : i32
    %c0_i32_0 = arith.constant 0 : i32
    return %arg0, %c0_i32 : i32, i32
  }
}

</mosaic_0001>

<llo_original>
// kernel: tpu_custom_call.1
$region0: #{tpu_custom_call.1}
  #allocation0 [shape = 'u32[]', space=smem, size = 0x4, offset = 0x4, fixed_abs, tag = 'smem constant byte address 0x4 - core index']
  #allocation1 [shape = 'u32[144,128]{1,0:T(1,128)}', space=vmem, size = 0x12000, scoped, tag = 'internal scratch']
  %s0 = inlined_call_operand.hbm [shape: f32[32,32], index: 0, kind: input, shape index: {}]
  %s1 = inlined_call_operand.hbm [shape: bf16[32,400], index: 1, kind: input, shape index: {}]
  %s2 = inlined_call_operand.hbm [shape: f32[1,400], index: 2, kind: input, shape index: {}]
  %s3 = inlined_call_operand.hbm [shape: bf16[400,784], index: 3, kind: input, shape index: {}]
  %s4 = inlined_call_operand.vmem [shape: f32[1,784], index: 4, kind: input, shape index: {}]
  %s5 = inlined_call_operand.hbm [shape: bf16[32,784], index: 5, kind: output, shape index: {}]
  %s6 = sld [smem:[#allocation0]]
  $region69: #{tpu_custom_call.1} parent=0
    _
  %s8 = ssub.s32 1, %s6
  %s9 = scalar_select 0, %s8, %s6
  $region1: #{tpu_custom_call.1} parent=0
    #allocation2 [shape = 'u8[16384]{0}', space=vmem, size = 0x4000, scoped, tag = 'input window, operand 0']
    #allocation3 [shape = 's32[2]{0}', space=sflag, size = 0x8, scoped, tag = 'scoped memory for tpu_custom_call.1']
    #allocation4 [shape = 's32[2]{0}', space=sflag, size = 0x8, scoped, tag = 'scoped memory for tpu_custom_call.1']
    #allocation5 [shape = 'u8[32768]{0}', space=vmem, size = 0x8000, scoped, tag = 'input window, operand 1, single buffered']
    #allocation6 [shape = 's32[1]{0}', space=sflag, size = 0x4, scoped, tag = 'scoped memory for tpu_custom_call.1']
    #allocation7 [shape = 'u8[2048]{0}', space=vmem, size = 0x800, scoped, tag = 'input window, operand 2, single buffered']
    #allocation8 [shape = 'u8[716800]{0}', space=vmem, size = 0xaf000, scoped, tag = 'input window, operand 3, single buffered']
    #allocation9 [shape = 's32[1]{0}', space=sflag, size = 0x4, scoped, tag = 'scoped memory for tpu_custom_call.1']
    #allocation10 [shape = 'u8[57344]{0}', space=vmem, size = 0xe000, scoped, tag = 'output window, operand 0']
    %10 = vsyncpa [#allocation3], 0
    %s11 = scalar_lea.sflag [#allocation3], 1
    %12 = vsyncpa %s11, 0
    %13 = vsyncpa [#allocation6], 0
    %14 = vsyncpa [#allocation9], 0
    %15 = vsyncpa [#allocation4], 0
    %s16 = scalar_lea.sflag [#allocation4], 1
    %17 = vsyncpa %s16, 0
    loop: start=0, step=1, limit=4
    $region2: #{tpu_custom_call.1} parent=1 // loop_pre_header
      _
    $region3: #{tpu_custom_call.1} parent=1 // loop_header
      %s19 = sphi 0, %s23
      %p20 = scmp.ge.s32.totalorder %s19, 4
      %s29 = sphi 0, %s31
      %s32 = sphi 0, %s29
      %s33 = sphi 0, %s32
      %s49 = sphi 0, %s33
      %s53 = sphi 0, %s53
      %s55 = sphi 0, %s53
      %s56 = sphi 0, %s55
      %s70 = sphi 0, %s56
      %s74 = sphi 0, %s74
      %s76 = sphi 0, %s74
      %s77 = sphi 0, %s76
      %s91 = sphi 0, %s77
      %s95 = sphi 0, %s95
      %s97 = sphi 0, %s95
      %s98 = sphi 0, %s97
      %s112 = sphi 0, %s98
      %s116 = sphi 0, %s116
      %s118 = sphi 0, %s116
      %s119 = sphi 0, %s118
      %s133 = sphi 0, %s119
      %s139 = sphi 0, %s141
      %s142 = sphi 0, %s139
      %s143 = sphi 0, %s142
      %s159 = sphi 0, %s143
    $region4: #{tpu_custom_call.1} parent=1 // loop_header_branch
      %22 = sbr.rel (%p20) target = $region8
    $region5: #{tpu_custom_call.1} parent=1 // loop_body
      %s24 = ssub.s32 %s19, 1
      %s25 = ssub.s32 %s19, 2
      %s26 = sadd.s32 %s19, 1
      %s27 = ssub.s32 %s19, %s26
      %p28 = scmp.eq.s32.totalorder %s27, 0
      %s30 = sadd.s32 %s29, 1
      %s31 = scalar_select %p28, %s29, %s30
      %p34 = pneg %p28
      %p35 = scmp.eq.s32.totalorder %s19, 1
      %p36 = por %p34, %p35
      %p37 = scmp.ne.s32.totalorder %s29, %s32
      %p38 = scmp.eq.s32.totalorder %s19, 0
      %p39 = por %p37, %p38
      %p40 = scmp.ne.s32.totalorder %s29, %s32
      %p41 = scmp.eq.s32.totalorder %s24, 1
      %p42 = por %p40, %p41
      %p43 = scmp.ne.s32.totalorder %s32, %s33
      %p44 = scmp.eq.s32.totalorder %s24, 0
      %p45 = por %p43, %p44
      %p46 = scmp.ne.s32.totalorder %s32, %s33
      %p47 = scmp.eq.s32.totalorder %s25, 1
      %p48 = por %p46, %p47
      %p50 = scmp.ne.s32.totalorder %s33, %s49
      %p51 = scmp.eq.s32.totalorder %s25, 0
      %p52 = por %p50, %p51
      %s54 = sadd.s32 %s53, 1
      %p57 = scmp.eq.s32.totalorder %s19, 1
      %p58 = scmp.ne.s32.totalorder %s53, %s55
      %p59 = scmp.eq.s32.totalorder %s19, 0
      %p60 = por %p58, %p59
      %p61 = scmp.ne.s32.totalorder %s53, %s55
      %p62 = scmp.eq.s32.totalorder %s24, 1
      %p63 = por %p61, %p62
      %p64 = scmp.ne.s32.totalorder %s55, %s56
      %p65 = scmp.eq.s32.totalorder %s24, 0
      %p66 = por %p64, %p65
      %p67 = scmp.ne.s32.totalorder %s55, %s56
      %p68 = scmp.eq.s32.totalorder %s25, 1
      %p69 = por %p67, %p68
      %p71 = scmp.ne.s32.totalorder %s56, %s70
      %p72 = scmp.eq.s32.totalorder %s25, 0
      %p73 = por %p71, %p72
      %s75 = sadd.s32 %s74, 1
      %p78 = scmp.eq.s32.totalorder %s19, 1
      %p79 = scmp.ne.s32.totalorder %s74, %s76
      %p80 = scmp.eq.s32.totalorder %s19, 0
      %p81 = por %p79, %p80
      %p82 = scmp.ne.s32.totalorder %s74, %s76
      %p83 = scmp.eq.s32.totalorder %s24, 1
      %p84 = por %p82, %p83
      %p85 = scmp.ne.s32.totalorder %s76, %s77
      %p86 = scmp.eq.s32.totalorder %s24, 0
      %p87 = por %p85, %p86
      %p88 = scmp.ne.s32.totalorder %s76, %s77
      %p89 = scmp.eq.s32.totalorder %s25, 1
      %p90 = por %p88, %p89
      %p92 = scmp.ne.s32.totalorder %s77, %s91
      %p93 = scmp.eq.s32.totalorder %s25, 0
      %p94 = por %p92, %p93
      %s96 = sadd.s32 %s95, 1
      %p99 = scmp.eq.s32.totalorder %s19, 1
      %p100 = scmp.ne.s32.totalorder %s95, %s97
      %p101 = scmp.eq.s32.totalorder %s19, 0
      %p102 = por %p100, %p101
      %p103 = scmp.ne.s32.totalorder %s95, %s97
      %p104 = scmp.eq.s32.totalorder %s24, 1
      %p105 = por %p103, %p104
      %p106 = scmp.ne.s32.totalorder %s97, %s98
      %p107 = scmp.eq.s32.totalorder %s24, 0
      %p108 = por %p106, %p107
      %p109 = scmp.ne.s32.totalorder %s97, %s98
      %p110 = scmp.eq.s32.totalorder %s25, 1
      %p111 = por %p109, %p110
      %p113 = scmp.ne.s32.totalorder %s98, %s112
      %p114 = scmp.eq.s32.totalorder %s25, 0
      %p115 = por %p113, %p114
      %s117 = sadd.s32 %s116, 1
      %p120 = scmp.eq.s32.totalorder %s19, 1
      %p121 = scmp.ne.s32.totalorder %s116, %s118
      %p122 = scmp.eq.s32.totalorder %s19, 0
      %p123 = por %p121, %p122
      %p124 = scmp.ne.s32.totalorder %s116, %s118
      %p125 = scmp.eq.s32.totalorder %s24, 1
      %p126 = por %p124, %p125
      %p127 = scmp.ne.s32.totalorder %s118, %s119
      %p128 = scmp.eq.s32.totalorder %s24, 0
      %p129 = por %p127, %p128
      %p130 = scmp.ne.s32.totalorder %s118, %s119
      %p131 = scmp.eq.s32.totalorder %s25, 1
      %p132 = por %p130, %p131
      %p134 = scmp.ne.s32.totalorder %s119, %s133
      %p135 = scmp.eq.s32.totalorder %s25, 0
      %p136 = por %p134, %p135
      %s137 = ssub.s32 %s19, %s26
      %p138 = scmp.eq.s32.totalorder %s137, 0
      %s140 = sadd.s32 %s139, 1
      %s141 = scalar_select %p138, %s139, %s140
      %p144 = pneg %p138
      %p145 = scmp.eq.s32.totalorder %s19, 1
      %p146 = por %p144, %p145
      %p147 = scmp.ne.s32.totalorder %s139, %s142
      %p148 = scmp.eq.s32.totalorder %s19, 0
      %p149 = por %p147, %p148
      %p150 = scmp.ne.s32.totalorder %s139, %s142
      %p151 = scmp.eq.s32.totalorder %s24, 1
      %p152 = por %p150, %p151
      %p153 = scmp.ne.s32.totalorder %s142, %s143
      %p154 = scmp.eq.s32.totalorder %s24, 0
      %p155 = por %p153, %p154
      %p156 = scmp.ne.s32.totalorder %s142, %s143
      %p157 = scmp.eq.s32.totalorder %s25, 1
      %p158 = por %p156, %p157
      %p160 = scmp.ne.s32.totalorder %s143, %s159
      %p161 = scmp.eq.s32.totalorder %s25, 0
      %p162 = por %p160, %p161
      %p163 = scmp.le.s32.totalorder 1, %s19
      %p164 = scmp.lt.s32.totalorder %s19, 3
      %p165 = pnand %p163, %p164
      %p166 = pneg %p165
      // Predicated region
      $region9: #{tpu_custom_call.1} parent=5 // pred_check
        _
      $region10: #{tpu_custom_call.1} parent=5 // pred_check_branch
        %168 = sbr.rel (%p165) target = $region12
      $region11: #{tpu_custom_call.1} parent=5 // pred_region
        %s169 = ssub.s32 %s19, 1
        // Predicated region
        $region13: #{tpu_custom_call.1} parent=11 // pred_check
          %p170 = pneg %p66
        $region14: #{tpu_custom_call.1} parent=11 // pred_check_branch
          %172 = sbr.rel (%p170) target = $region16
        $region15: #{tpu_custom_call.1} parent=11 // pred_region
          %s174 = ssub.s32 1024, 1024
          %175 = vsyncadd [#allocation6], %s174
          %s176 = sshll.u32 [#allocation5], 4
          %s177 = int_to_ptr.vmem [resolvable:$true] %s176
          %182 = dma.hbm_to_vmem [thread:$0]  %s1, 1024, %s177, [#allocation6], 256, 256, 16
        $region16: #{tpu_custom_call.1} parent=11 // pred_fallthru
          _
        // Predicated region
        $region17: #{tpu_custom_call.1} parent=11 // pred_check
          %p183 = pneg %p87
        $region18: #{tpu_custom_call.1} parent=11 // pred_check_branch
          %185 = sbr.rel (%p183) target = $region20
        $region19: #{tpu_custom_call.1} parent=11 // pred_region
          %s187 = ssub.s32 64, 64
          %188 = vsyncadd [#allocation6], %s187
          %s190 = sshll.u32 [#allocation7], 4
          %s191 = int_to_ptr.vmem [resolvable:$true] %s190
          %193 = dma.hbm_to_vmem [thread:$0]  %s2, 64, %s191, [#allocation6]
        $region20: #{tpu_custom_call.1} parent=11 // pred_fallthru
          _
        // Predicated region
        $region21: #{tpu_custom_call.1} parent=11 // pred_check
          %p194 = pneg %p108
        $region22: #{tpu_custom_call.1} parent=11 // pred_check_branch
          %196 = sbr.rel (%p194) target = $region24
        $region23: #{tpu_custom_call.1} parent=11 // pred_region
          %s198 = ssub.s32 22400, 22400
          %199 = vsyncadd [#allocation9], %s198
          %s200 = sshll.u32 [#allocation8], 4
          %s201 = int_to_ptr.vmem [resolvable:$true] %s200
          %206 = dma.hbm_to_vmem [thread:$0]  %s3, 22400, %s201, [#allocation9], 448, 448, 28
        $region24: #{tpu_custom_call.1} parent=11 // pred_fallthru
          _
        // Predicated region
        $region25: #{tpu_custom_call.1} parent=11 // pred_check
          %p207 = pneg %p129
        $region26: #{tpu_custom_call.1} parent=11 // pred_check_branch
          %209 = sbr.rel (%p207) target = $region28
        $region27: #{tpu_custom_call.1} parent=11 // pred_region
          _
        $region28: #{tpu_custom_call.1} parent=11 // pred_fallthru
          _
      $region12: #{tpu_custom_call.1} parent=5 // pred_fallthru
        _
      %p210 = scmp.lt.s32.totalorder %s19, 2
      // Predicated region
      $region29: #{tpu_custom_call.1} parent=5 // pred_check
        %p211 = pneg %p210
      $region30: #{tpu_custom_call.1} parent=5 // pred_check_branch
        %213 = sbr.rel (%p211) target = $region32
      $region31: #{tpu_custom_call.1} parent=5 // pred_region
        // Predicated region
        $region33: #{tpu_custom_call.1} parent=31 // pred_check
          %p214 = pneg %p39
        $region34: #{tpu_custom_call.1} parent=31 // pred_check_branch
          %216 = sbr.rel (%p214) target = $region36
        $region35: #{tpu_custom_call.1} parent=31 // pred_region
          %s217 = sand.u32 %s29, 1
          %s218 = scalar_lea.sflag [#allocation3], %s217
          %s219 = sand.u32 %s29, 1
          %s220 = smul.addr %s219, 16
          %s221 = scalar_lea.vmem [#allocation2], %s220
          %s222 = smul.u32 2, %s19
          %s224 = ssub.s32 256, 256
          %225 = vsyncadd %s218, %s224
          %s226 = smul.addr %s222, 128
          %s227 = scalar_lea.hbm %s0, %s226
          %s228 = sshll.u32 %s221, 4
          %s229 = int_to_ptr.vmem [resolvable:$true] %s228
          %234 = dma.hbm_to_vmem [thread:$0]  %s227, 256, %s229, %s218, 128, 128, 8
        $region36: #{tpu_custom_call.1} parent=31 // pred_fallthru
          _
      $region32: #{tpu_custom_call.1} parent=5 // pred_fallthru
        _
      %p235 = scmp.le.s32.totalorder 1, %s19
      %p236 = scmp.lt.s32.totalorder %s19, 3
      %p237 = pnand %p235, %p236
      %p238 = pneg %p237
      // Predicated region
      $region37: #{tpu_custom_call.1} parent=5 // pred_check
        _
      $region38: #{tpu_custom_call.1} parent=5 // pred_check_branch
        %240 = sbr.rel (%p237) target = $region40
      $region39: #{tpu_custom_call.1} parent=5 // pred_region
        %s241 = ssub.s32 %s19, 1
        %s242 = sand.u32 %s32, 1
        %s243 = scalar_lea.sflag [#allocation3], %s242
        %s244 = sand.u32 %s32, 1
        %s245 = smul.addr %s244, 16
        %s246 = scalar_lea.vmem [#allocation2], %s245
        // Predicated region
        $region41: #{tpu_custom_call.1} parent=39 // pred_check
          %p247 = pneg %p45
        $region42: #{tpu_custom_call.1} parent=39 // pred_check_branch
          %249 = sbr.rel (%p247) target = $region44
        $region43: #{tpu_custom_call.1} parent=39 // pred_region
          %250 = dma.done %s243, 256
        $region44: #{tpu_custom_call.1} parent=39 // pred_fallthru
          _
        // Predicated region
        $region45: #{tpu_custom_call.1} parent=39 // pred_check
          %p251 = pneg %p66
        $region46: #{tpu_custom_call.1} parent=39 // pred_check_branch
          %253 = sbr.rel (%p251) target = $region48
        $region47: #{tpu_custom_call.1} parent=39 // pred_region
          %254 = dma.done [#allocation6], 1024
        $region48: #{tpu_custom_call.1} parent=39 // pred_fallthru
          _
        // Predicated region
        $region49: #{tpu_custom_call.1} parent=39 // pred_check
          %p255 = pneg %p87
        $region50: #{tpu_custom_call.1} parent=39 // pred_check_branch
          %257 = sbr.rel (%p255) target = $region52
        $region51: #{tpu_custom_call.1} parent=39 // pred_region
          %258 = dma.done [#allocation6], 64
        $region52: #{tpu_custom_call.1} parent=39 // pred_fallthru
          _
        // Predicated region
        $region53: #{tpu_custom_call.1} parent=39 // pred_check
          %p259 = pneg %p108
        $region54: #{tpu_custom_call.1} parent=39 // pred_check_branch
          %261 = sbr.rel (%p259) target = $region56
        $region55: #{tpu_custom_call.1} parent=39 // pred_region
          %262 = dma.done [#allocation9], 22400
        $region56: #{tpu_custom_call.1} parent=39 // pred_fallthru
          _
        %s263 = sand.u32 %s32, 1
        %s264 = scalar_lea.sflag [#allocation3], %s263
        %s265 = sand.u32 %s32, 1
        %s266 = smul.addr %s265, 16
        %s267 = scalar_lea.vmem [#allocation2], %s266
        %p268 = pneg %p45
        %p269 = pneg %p42
        %p270 = pneg %p66
        %p271 = pneg %p63
        %p272 = pneg %p87
        %p273 = pneg %p84
        %p274 = pneg %p108
        %p275 = pneg %p105
        %p276 = pneg %p129
        %p277 = pneg %p126
        %p278 = pneg %p155
        %p279 = pneg %p152
        %s280 = sand.u32 %s142, 1
        %s281 = scalar_lea.sflag [#allocation4], %s280
        %s282 = sand.u32 %s142, 1
        %s283 = smul.addr %s282, 56
        %s284 = scalar_lea.vmem [#allocation10], %s283
        %s285 = smul.u32 2, %s24
        %s286 = smul.u32 2, %s24
        %v288 = vld [vmem:[%s246] sm:$0xff]
        %v289 = vld [vmem:[%s246 + $0x8] sm:$0xff]
        %v290 = vpack.c.bf16 %v289, %v288
        %v291 = vld [vmem:[#allocation5] sm:$0xff]
        %v292 = vld [vmem:[#allocation5 + $0x8] sm:$0xff]
        %v293 = vld [vmem:[#allocation5 + $0x10] sm:$0xff]
        %v294 = vld [vmem:[#allocation5 + $0x18] sm:$0xff]
        %v295 = vld [vmem:[#allocation5 + $0x20] sm:$0xff]
        %v296 = vld [vmem:[#allocation5 + $0x28] sm:$0xff]
        %v297 = vld [vmem:[#allocation5 + $0x30] sm:$0xff]
        %v298 = vld [vmem:[#allocation5 + $0x38] sm:$0xff]
        %v299 = vld [vmem:[#allocation7] sm:$0xf]
        %v301 = vlaneseq
        %v302 = vshrl.u32 %v301, 7
        %v303 = vsub.s32 0, %v302
        %v304 = vrot.slane %v299, %v303
        %v305 = vlaneseq
        %v306 = vshrl.u32 %v305, 7
        %v307 = vsub.s32 1, %v306
        %v308 = vrot.slane %v299, %v307
        %v309 = vlaneseq
        %v310 = vshrl.u32 %v309, 7
        %v311 = vsub.s32 2, %v310
        %v312 = vrot.slane %v299, %v311
        %v313 = vlaneseq
        %v314 = vshrl.u32 %v313, 7
        %v315 = vsub.s32 3, %v314
        %v316 = vrot.slane %v299, %v315
        %v329 = vunpack.c.l.b16 %v291
        %v330 = vunpack.c.h.b16 %v291
        %v331 = vunpack.c.l.b16 %v292
        %v332 = vunpack.c.h.b16 %v292
        %v333 = vunpack.c.l.b16 %v293
        %v334 = vunpack.c.h.b16 %v293
        %v335 = vunpack.c.l.b16 %v294
        %v336 = vunpack.c.h.b16 %v294
        %v337 = vunpack.c.l.b16 %v295
        %v338 = vunpack.c.h.b16 %v295
        %v339 = vunpack.c.l.b16 %v296
        %v340 = vunpack.c.h.b16 %v296
        %v341 = vunpack.c.l.b16 %v297
        %v342 = vunpack.c.h.b16 %v297
        %v343 = vunpack.c.l.b16 %v298
        %v344 = vunpack.c.h.b16 %v298
        %v345 = vpack.c.b16 %v333, %v329
        %v346 = vpack.c.b16 %v334, %v330
        %v347 = vpack.c.b16 %v335, %v331
        %v348 = vpack.c.b16 %v336, %v332
        %v349 = vpack.c.b16 %v341, %v337
        %v350 = vpack.c.b16 %v342, %v338
        %v351 = vpack.c.b16 %v343, %v339
        %v352 = vpack.c.b16 %v344, %v340
        %vm361 = vcmask 261120
        %v363 = vsel %vm361, %v290, 0
        %365 = vmatprep.subr.bf16.mxu0 0
        %366 = vmatpush1.bf16.msra.mxu0 0
        %367 = vmatprep.subr.bf16.mxu0 0
        %368 = vmatpush1.bf16.msra.mxu0 0
        %369 = vmatprep.subr.bf16.mxu0 0
        %370 = vmatpush1.bf16.msra.mxu0 0
        %371 = vmatprep.subr.bf16.mxu0 0
        %372 = vmatpush1.bf16.msra.mxu0 0
        %373 = vmatprep.subr.bf16.mxu0 0
        %374 = vmatpush1.bf16.msra.mxu0 0
        %375 = vmatprep.subr.bf16.mxu0 0
        %376 = vmatpush1.bf16.msra.mxu0 0
        %377 = vmatprep.subr.bf16.mxu0 %v350
        %378 = vmatpush1.bf16.msra.mxu0 %v349
        %379 = vmatprep.subr.bf16.mxu0 %v346
        %380 = vmatpush1.bf16.msra.mxu0 %v345
        %381 = vmatprep.subr.bf16.mxu0 0
        %382 = vmatpush2.bf16.msra.mxu0 0
        %383 = vmatprep.subr.bf16.mxu0 0
        %384 = vmatpush2.bf16.msra.mxu0 0
        %385 = vmatprep.subr.bf16.mxu0 0
        %386 = vmatpush2.bf16.msra.mxu0 0
        %387 = vmatprep.subr.bf16.mxu0 0
        %388 = vmatpush2.bf16.msra.mxu0 0
        %389 = vmatprep.subr.bf16.mxu0 0
        %390 = vmatpush2.bf16.msra.mxu0 0
        %391 = vmatprep.subr.bf16.mxu0 0
        %392 = vmatpush2.bf16.msra.mxu0 0
        %393 = vmatprep.subr.bf16.mxu0 0
        %394 = vmatpush2.bf16.msra.mxu0 0
        %395 = vmatprep.subr.bf16.mxu0 0
        %396 = vmatpush2.bf16.msra.mxu0 0
        %397 = vmatprep.mubr.bf16.mxu0 0
        %398 = vmatmul.mubr.bf16.gmra.mxu0 %v363
        %v399 = vpop.f32.mrf.mxu0
        %v400 = vadd.f32 %v304, %v399
        %v401 = vpop.f32.mrf.mxu0
        %v402 = vadd.f32 %v308, %v401
        %v403 = vpop.f32.mrf.mxu0
        %v404 = vadd.f32 %v304, %v403
        %v405 = vpop.f32.mrf.mxu0
        %v406 = vadd.f32 %v308, %v405
        %407 = vdwg.mxu0
        %408 = vmatprep.subr.bf16.mxu0 0
        %409 = vmatpush1.bf16.msra.mxu0 0
        %410 = vmatprep.subr.bf16.mxu0 0
        %411 = vmatpush1.bf16.msra.mxu0 0
        %412 = vmatprep.subr.bf16.mxu0 0
        %413 = vmatpush1.bf16.msra.mxu0 0
        %414 = vmatprep.subr.bf16.mxu0 0
        %415 = vmatpush1.bf16.msra.mxu0 0
        %416 = vmatprep.subr.bf16.mxu0 0
        %417 = vmatpush1.bf16.msra.mxu0 0
        %418 = vmatprep.subr.bf16.mxu0 0
        %419 = vmatpush1.bf16.msra.mxu0 0
        %420 = vmatprep.subr.bf16.mxu0 %v352
        %421 = vmatpush1.bf16.msra.mxu0 %v351
        %422 = vmatprep.subr.bf16.mxu0 %v348
        %423 = vmatpush1.bf16.msra.mxu0 %v347
        %424 = vmatprep.subr.bf16.mxu0 0
        %425 = vmatpush2.bf16.msra.mxu0 0
        %426 = vmatprep.subr.bf16.mxu0 0
        %427 = vmatpush2.bf16.msra.mxu0 0
        %428 = vmatprep.subr.bf16.mxu0 0
        %429 = vmatpush2.bf16.msra.mxu0 0
        %430 = vmatprep.subr.bf16.mxu0 0
        %431 = vmatpush2.bf16.msra.mxu0 0
        %432 = vmatprep.subr.bf16.mxu0 0
        %433 = vmatpush2.bf16.msra.mxu0 0
        %434 = vmatprep.subr.bf16.mxu0 0
        %435 = vmatpush2.bf16.msra.mxu0 0
        %436 = vmatprep.subr.bf16.mxu0 0
        %437 = vmatpush2.bf16.msra.mxu0 0
        %438 = vmatprep.subr.bf16.mxu0 0
        %439 = vmatpush2.bf16.msra.mxu0 0
        %440 = vmatprep.mubr.bf16.mxu0 0
        %441 = vmatmul.mubr.bf16.gmra.mxu0 %v363
        %v442 = vpop.f32.mrf.mxu0
        %v443 = vadd.f32 %v312, %v442
        %v444 = vpop.f32.mrf.mxu0
        %v445 = vadd.f32 %v316, %v444
        %v446 = vpop.f32.mrf.mxu0
        %v447 = vadd.f32 %v312, %v446
        %v448 = vpop.f32.mrf.mxu0
        %v449 = vadd.f32 %v316, %v448
        %450 = vdwg.mxu0
        %v451 = vmax.f32 %v400, 0.0
        %v452 = vmax.f32 %v402, 0.0
        %v453 = vmax.f32 %v443, 0.0
        %v454 = vmax.f32 %v445, 0.0
        %v455 = vmax.f32 %v404, 0.0
        %v456 = vmax.f32 %v406, 0.0
        %v457 = vmax.f32 %v447, 0.0
        %v458 = vmax.f32 %v449, 0.0
        %v459 = vpack.c.bf16 %v455, %v451
        %v460 = vpack.c.bf16 %v456, %v452
        %v461 = vpack.c.bf16 %v457, %v453
        %v462 = vpack.c.bf16 %v458, %v454
        %v463 = vld [vmem:[#allocation8] sm:$0xff]
        %v464 = vld [vmem:[#allocation8 + $0x8] sm:$0xff]
        %v465 = vld [vmem:[#allocation8 + $0x10] sm:$0xff]
        %v466 = vld [vmem:[#allocation8 + $0x18] sm:$0xf]
        %v467 = vld [vmem:[#allocation8 + $0x1c] sm:$0xff]
        %v468 = vld [vmem:[#allocation8 + $0x24] sm:$0xff]
        %v469 = vld [vmem:[#allocation8 + $0x2c] sm:$0xff]
        %v470 = vld [vmem:[#allocation8 + $0x34] sm:$0xf]
        %v471 = vld [vmem:[#allocation8 + $0x38] sm:$0xff]
        %v472 = vld [vmem:[#allocation8 + $0x40] sm:$0xff]
        %v473 = vld [vmem:[#allocation8 + $0x48] sm:$0xff]
        %v474 = vld [vmem:[#allocation8 + $0x50] sm:$0xf]
        %v475 = vld [vmem:[#allocation8 + $0x54] sm:$0xff]
        %v476 = vld [vmem:[#allocation8 + $0x5c] sm:$0xff]
        %v477 = vld [vmem:[#allocation8 + $0x64] sm:$0xff]
        %v478 = vld [vmem:[#allocation8 + $0x6c] sm:$0xf]
        %v479 = vld [vmem:[#allocation8 + $0x70] sm:$0xff]
        %v480 = vld [vmem:[#allocation8 + $0x78] sm:$0xff]
        %v481 = vld [vmem:[#allocation8 + $0x80] sm:$0xff]
        %v482 = vld [vmem:[#allocation8 + $0x88] sm:$0xf]
        %v483 = vld [vmem:[#allocation8 + $0x8c] sm:$0xff]
        %v484 = vld [vmem:[#allocation8 + $0x94] sm:$0xff]
        %v485 = vld [vmem:[#allocation8 + $0x9c] sm:$0xff]
        %v486 = vld [vmem:[#allocation8 + $0xa4] sm:$0xf]
        %v487 = vld [vmem:[#allocation8 + $0xa8] sm:$0xff]
        %v488 = vld [vmem:[#allocation8 + $0xb0] sm:$0xff]
        %v489 = vld [vmem:[#allocation8 + $0xb8] sm:$0xff]
        %v490 = vld [vmem:[#allocation8 + $0xc0] sm:$0xf]
        %v491 = vld [vmem:[#allocation8 + $0xc4] sm:$0xff]
        %v492 = vld [vmem:[#allocation8 + $0xcc] sm:$0xff]
        %v493 = vld [vmem:[#allocation8 + $0xd4] sm:$0xff]
        %v494 = vld [vmem:[#allocation8 + $0xdc] sm:$0xf]
        %v495 = vld [vmem:[#allocation8 + $0xe0] sm:$0xff]
        %v496 = vld [vmem:[#allocation8 + $0xe8] sm:$0xff]
        %v497 = vld [vmem:[#allocation8 + $0xf0] sm:$0xff]
        %v498 = vld [vmem:[#allocation8 + $0xf8] sm:$0xf]
        %v499 = vld [vmem:[#allocation8 + $0xfc] sm:$0xff]
        %v500 = vld [vmem:[#allocation8 + $0x104] sm:$0xff]
        %v501 = vld [vmem:[#allocation8 + $0x10c] sm:$0xff]
        %v502 = vld [vmem:[#allocation8 + $0x114] sm:$0xf]
        %v503 = vld [vmem:[#allocation8 + $0x118] sm:$0xff]
        %v504 = vld [vmem:[#allocation8 + $0x120] sm:$0xff]
        %v505 = vld [vmem:[#allocation8 + $0x128] sm:$0xff]
        %v506 = vld [vmem:[#allocation8 + $0x130] sm:$0xf]
        %v507 = vld [vmem:[#allocation8 + $0x134] sm:$0xff]
        %v508 = vld [vmem:[#allocation8 + $0x13c] sm:$0xff]
        %v509 = vld [vmem:[#allocation8 + $0x144] sm:$0xff]
        %v510 = vld [vmem:[#allocation8 + $0x14c] sm:$0xf]
        %v511 = vld [vmem:[#allocation8 + $0x150] sm:$0xff]
        %v512 = vld [vmem:[#allocation8 + $0x158] sm:$0xff]
        %v513 = vld [vmem:[#allocation8 + $0x160] sm:$0xff]
        %v514 = vld [vmem:[#allocation8 + $0x168] sm:$0xf]
        %v515 = vld [vmem:[#allocation8 + $0x16c] sm:$0xff]
        %v516 = vld [vmem:[#allocation8 + $0x174] sm:$0xff]
        %v517 = vld [vmem:[#allocation8 + $0x17c] sm:$0xff]
        %v518 = vld [vmem:[#allocation8 + $0x184] sm:$0xf]
        %v519 = vld [vmem:[#allocation8 + $0x188] sm:$0xff]
        %v520 = vld [vmem:[#allocation8 + $0x190] sm:$0xff]
        %v521 = vld [vmem:[#allocation8 + $0x198] sm:$0xff]
        %v522 = vld [vmem:[#allocation8 + $0x1a0] sm:$0xf]
        %v523 = vld [vmem:[#allocation8 + $0x1a4] sm:$0xff]
        %v524 = vld [vmem:[#allocation8 + $0x1ac] sm:$0xff]
        %v525 = vld [vmem:[#allocation8 + $0x1b4] sm:$0xff]
        %v526 = vld [vmem:[#allocation8 + $0x1bc] sm:$0xf]
        %v527 = vld [vmem:[#allocation8 + $0x1c0] sm:$0xff]
        %v528 = vld [vmem:[#allocation8 + $0x1c8] sm:$0xff]
        %v529 = vld [vmem:[#allocation8 + $0x1d0] sm:$0xff]
        %v530 = vld [vmem:[#allocation8 + $0x1d8] sm:$0xf]
        %v531 = vld [vmem:[#allocation8 + $0x1dc] sm:$0xff]
        %v532 = vld [vmem:[#allocation8 + $0x1e4] sm:$0xff]
        %v533 = vld [vmem:[#allocation8 + $0x1ec] sm:$0xff]
        %v534 = vld [vmem:[#allocation8 + $0x1f4] sm:$0xf]
        %v535 = vld [vmem:[#allocation8 + $0x1f8] sm:$0xff]
        %v536 = vld [vmem:[#allocation8 + $0x200] sm:$0xff]
        %v537 = vld [vmem:[#allocation8 + $0x208] sm:$0xff]
        %v538 = vld [vmem:[#allocation8 + $0x210] sm:$0xf]
        %v539 = vld [vmem:[#allocation8 + $0x214] sm:$0xff]
        %v540 = vld [vmem:[#allocation8 + $0x21c] sm:$0xff]
        %v541 = vld [vmem:[#allocation8 + $0x224] sm:$0xff]
        %v542 = vld [vmem:[#allocation8 + $0x22c] sm:$0xf]
        %v543 = vld [vmem:[#allocation8 + $0x230] sm:$0xff]
        %v544 = vld [vmem:[#allocation8 + $0x238] sm:$0xff]
        %v545 = vld [vmem:[#allocation8 + $0x240] sm:$0xff]
        %v546 = vld [vmem:[#allocation8 + $0x248] sm:$0xf]
        %v547 = vld [vmem:[#allocation8 + $0x24c] sm:$0xff]
        %v548 = vld [vmem:[#allocation8 + $0x254] sm:$0xff]
        %v549 = vld [vmem:[#allocation8 + $0x25c] sm:$0xff]
        %v550 = vld [vmem:[#allocation8 + $0x264] sm:$0xf]
        %v551 = vld [vmem:[#allocation8 + $0x268] sm:$0xff]
        %v552 = vld [vmem:[#allocation8 + $0x270] sm:$0xff]
        %v553 = vld [vmem:[#allocation8 + $0x278] sm:$0xff]
        %v554 = vld [vmem:[#allocation8 + $0x280] sm:$0xf]
        %v555 = vld [vmem:[#allocation8 + $0x284] sm:$0xff]
        %v556 = vld [vmem:[#allocation8 + $0x28c] sm:$0xff]
        %v557 = vld [vmem:[#allocation8 + $0x294] sm:$0xff]
        %v558 = vld [vmem:[#allocation8 + $0x29c] sm:$0xf]
        %v559 = vld [vmem:[#allocation8 + $0x2a0] sm:$0xff]
        %v560 = vld [vmem:[#allocation8 + $0x2a8] sm:$0xff]
        %v561 = vld [vmem:[#allocation8 + $0x2b0] sm:$0xff]
        %v562 = vld [vmem:[#allocation8 + $0x2b8] sm:$0xf]
        %v563 = vld [vmem:[#allocation8 + $0x2bc] sm:$0xff]
        %v564 = vld [vmem:[#allocation8 + $0x2c4] sm:$0xff]
        %v565 = vld [vmem:[#allocation8 + $0x2cc] sm:$0xff]
        %v566 = vld [vmem:[#allocation8 + $0x2d4] sm:$0xf]
        %v567 = vld [vmem:[#allocation8 + $0x2d8] sm:$0xff]
        %v568 = vld [vmem:[#allocation8 + $0x2e0] sm:$0xff]
        %v569 = vld [vmem:[#allocation8 + $0x2e8] sm:$0xff]
        %v570 = vld [vmem:[#allocation8 + $0x2f0] sm:$0xf]
        %v571 = vld [vmem:[#allocation8 + $0x2f4] sm:$0xff]
        %v572 = vld [vmem:[#allocation8 + $0x2fc] sm:$0xff]
        %v573 = vld [vmem:[#allocation8 + $0x304] sm:$0xff]
        %v574 = vld [vmem:[#allocation8 + $0x30c] sm:$0xf]
        %v575 = vld [vmem:[#allocation8 + $0x310] sm:$0xff]
        %v576 = vld [vmem:[#allocation8 + $0x318] sm:$0xff]
        %v577 = vld [vmem:[#allocation8 + $0x320] sm:$0xff]
        %v578 = vld [vmem:[#allocation8 + $0x328] sm:$0xf]
        %v579 = vld [vmem:[#allocation8 + $0x32c] sm:$0xff]
        %v580 = vld [vmem:[#allocation8 + $0x334] sm:$0xff]
        %v581 = vld [vmem:[#allocation8 + $0x33c] sm:$0xff]
        %v582 = vld [vmem:[#allocation8 + $0x344] sm:$0xf]
        %v583 = vld [vmem:[#allocation8 + $0x348] sm:$0xff]
        %v584 = vld [vmem:[#allocation8 + $0x350] sm:$0xff]
        %v585 = vld [vmem:[#allocation8 + $0x358] sm:$0xff]
        %v586 = vld [vmem:[#allocation8 + $0x360] sm:$0xf]
        %v587 = vld [vmem:[#allocation8 + $0x364] sm:$0xff]
        %v588 = vld [vmem:[#allocation8 + $0x36c] sm:$0xff]
        %v589 = vld [vmem:[#allocation8 + $0x374] sm:$0xff]
        %v590 = vld [vmem:[#allocation8 + $0x37c] sm:$0xf]
        %v591 = vld [vmem:[#allocation8 + $0x380] sm:$0xff]
        %v592 = vld [vmem:[#allocation8 + $0x388] sm:$0xff]
        %v593 = vld [vmem:[#allocation8 + $0x390] sm:$0xff]
        %v594 = vld [vmem:[#allocation8 + $0x398] sm:$0xf]
        %v595 = vld [vmem:[#allocation8 + $0x39c] sm:$0xff]
        %v596 = vld [vmem:[#allocation8 + $0x3a4] sm:$0xff]
        %v597 = vld [vmem:[#allocation8 + $0x3ac] sm:$0xff]
        %v598 = vld [vmem:[#allocation8 + $0x3b4] sm:$0xf]
        %v599 = vld [vmem:[#allocation8 + $0x3b8] sm:$0xff]
        %v600 = vld [vmem:[#allocation8 + $0x3c0] sm:$0xff]
        %v601 = vld [vmem:[#allocation8 + $0x3c8] sm:$0xff]
        %v602 = vld [vmem:[#allocation8 + $0x3d0] sm:$0xf]
        %v603 = vld [vmem:[#allocation8 + $0x3d4] sm:$0xff]
        %v604 = vld [vmem:[#allocation8 + $0x3dc] sm:$0xff]
        %v605 = vld [vmem:[#allocation8 + $0x3e4] sm:$0xff]
        %v606 = vld [vmem:[#allocation8 + $0x3ec] sm:$0xf]
        %v607 = vld [vmem:[#allocation8 + $0x3f0] sm:$0xff]
        %v608 = vld [vmem:[#allocation8 + $0x3f8] sm:$0xff]
        %v609 = vld [vmem:[#allocation8 + $0x400] sm:$0xff]
        %v610 = vld [vmem:[#allocation8 + $0x408] sm:$0xf]
        %v611 = vld [vmem:[#allocation8 + $0x40c] sm:$0xff]
        %v612 = vld [vmem:[#allocation8 + $0x414] sm:$0xff]
        %v613 = vld [vmem:[#allocation8 + $0x41c] sm:$0xff]
        %v614 = vld [vmem:[#allocation8 + $0x424] sm:$0xf]
        %v615 = vld [vmem:[#allocation8 + $0x428] sm:$0xff]
        %v616 = vld [vmem:[#allocation8 + $0x430] sm:$0xff]
        %v617 = vld [vmem:[#allocation8 + $0x438] sm:$0xff]
        %v618 = vld [vmem:[#allocation8 + $0x440] sm:$0xf]
        %v619 = vld [vmem:[#allocation8 + $0x444] sm:$0xff]
        %v620 = vld [vmem:[#allocation8 + $0x44c] sm:$0xff]
        %v621 = vld [vmem:[#allocation8 + $0x454] sm:$0xff]
        %v622 = vld [vmem:[#allocation8 + $0x45c] sm:$0xf]
        %v623 = vld [vmem:[#allocation8 + $0x460] sm:$0xff]
        %v624 = vld [vmem:[#allocation8 + $0x468] sm:$0xff]
        %v625 = vld [vmem:[#allocation8 + $0x470] sm:$0xff]
        %v626 = vld [vmem:[#allocation8 + $0x478] sm:$0xf]
        %v627 = vld [vmem:[#allocation8 + $0x47c] sm:$0xff]
        %v628 = vld [vmem:[#allocation8 + $0x484] sm:$0xff]
        %v629 = vld [vmem:[#allocation8 + $0x48c] sm:$0xff]
        %v630 = vld [vmem:[#allocation8 + $0x494] sm:$0xf]
        %v631 = vld [vmem:[#allocation8 + $0x498] sm:$0xff]
        %v632 = vld [vmem:[#allocation8 + $0x4a0] sm:$0xff]
        %v633 = vld [vmem:[#allocation8 + $0x4a8] sm:$0xff]
        %v634 = vld [vmem:[#allocation8 + $0x4b0] sm:$0xf]
        %v635 = vld [vmem:[#allocation8 + $0x4b4] sm:$0xff]
        %v636 = vld [vmem:[#allocation8 + $0x4bc] sm:$0xff]
        %v637 = vld [vmem:[#allocation8 + $0x4c4] sm:$0xff]
        %v638 = vld [vmem:[#allocation8 + $0x4cc] sm:$0xf]
        %v639 = vld [vmem:[#allocation8 + $0x4d0] sm:$0xff]
        %v640 = vld [vmem:[#allocation8 + $0x4d8] sm:$0xff]
        %v641 = vld [vmem:[#allocation8 + $0x4e0] sm:$0xff]
        %v642 = vld [vmem:[#allocation8 + $0x4e8] sm:$0xf]
        %v643 = vld [vmem:[#allocation8 + $0x4ec] sm:$0xff]
        %v644 = vld [vmem:[#allocation8 + $0x4f4] sm:$0xff]
        %v645 = vld [vmem:[#allocation8 + $0x4fc] sm:$0xff]
        %v646 = vld [vmem:[#allocation8 + $0x504] sm:$0xf]
        %v647 = vld [vmem:[#allocation8 + $0x508] sm:$0xff]
        %v648 = vld [vmem:[#allocation8 + $0x510] sm:$0xff]
        %v649 = vld [vmem:[#allocation8 + $0x518] sm:$0xff]
        %v650 = vld [vmem:[#allocation8 + $0x520] sm:$0xf]
        %v651 = vld [vmem:[#allocation8 + $0x524] sm:$0xff]
        %v652 = vld [vmem:[#allocation8 + $0x52c] sm:$0xff]
        %v653 = vld [vmem:[#allocation8 + $0x534] sm:$0xff]
        %v654 = vld [vmem:[#allocation8 + $0x53c] sm:$0xf]
        %v655 = vld [vmem:[#allocation8 + $0x540] sm:$0xff]
        %v656 = vld [vmem:[#allocation8 + $0x548] sm:$0xff]
        %v657 = vld [vmem:[#allocation8 + $0x550] sm:$0xff]
        %v658 = vld [vmem:[#allocation8 + $0x558] sm:$0xf]
        %v659 = vld [vmem:[#allocation8 + $0x55c] sm:$0xff]
        %v660 = vld [vmem:[#allocation8 + $0x564] sm:$0xff]
        %v661 = vld [vmem:[#allocation8 + $0x56c] sm:$0xff]
        %v662 = vld [vmem:[#allocation8 + $0x574] sm:$0xf]
        %v663 = vld [vmem:[%s4] sm:$0x7f]
        %v665 = vlaneseq
        %v666 = vshrl.u32 %v665, 7
        %v667 = vsub.s32 0, %v666
        %v668 = vrot.slane %v663, %v667
        %v669 = vlaneseq
        %v670 = vshrl.u32 %v669, 7
        %v671 = vsub.s32 1, %v670
        %v672 = vrot.slane %v663, %v671
        %v673 = vlaneseq
        %v674 = vshrl.u32 %v673, 7
        %v675 = vsub.s32 2, %v674
        %v676 = vrot.slane %v663, %v675
        %v677 = vlaneseq
        %v678 = vshrl.u32 %v677, 7
        %v679 = vsub.s32 3, %v678
        %v680 = vrot.slane %v663, %v679
        %v681 = vlaneseq
        %v682 = vshrl.u32 %v681, 7
        %v683 = vsub.s32 4, %v682
        %v684 = vrot.slane %v663, %v683
        %v685 = vlaneseq
        %v686 = vshrl.u32 %v685, 7
        %v687 = vsub.s32 5, %v686
        %v688 = vrot.slane %v663, %v687
        %v689 = vlaneseq
        %v690 = vshrl.u32 %v689, 7
        %v691 = vsub.s32 6, %v690
        %v692 = vrot.slane %v663, %v691
        %v900 = vunpack.c.l.b16 %v463
        %v901 = vunpack.c.h.b16 %v463
        %v902 = vunpack.c.l.b16 %v464
        %v903 = vunpack.c.h.b16 %v464
        %v904 = vunpack.c.l.b16 %v465
        %v905 = vunpack.c.h.b16 %v465
        %v906 = vunpack.c.l.b16 %v466
        %v907 = vunpack.c.l.b16 %v467
        %v908 = vunpack.c.h.b16 %v467
        %v909 = vunpack.c.l.b16 %v468
        %v910 = vunpack.c.h.b16 %v468
        %v911 = vunpack.c.l.b16 %v469
        %v912 = vunpack.c.h.b16 %v469
        %v913 = vunpack.c.l.b16 %v470
        %v914 = vunpack.c.l.b16 %v471
        %v915 = vunpack.c.h.b16 %v471
        %v916 = vunpack.c.l.b16 %v472
        %v917 = vunpack.c.h.b16 %v472
        %v918 = vunpack.c.l.b16 %v473
        %v919 = vunpack.c.h.b16 %v473
        %v920 = vunpack.c.l.b16 %v474
        %v921 = vunpack.c.l.b16 %v475
        %v922 = vunpack.c.h.b16 %v475
        %v923 = vunpack.c.l.b16 %v476
        %v924 = vunpack.c.h.b16 %v476
        %v925 = vunpack.c.l.b16 %v477
        %v926 = vunpack.c.h.b16 %v477
        %v927 = vunpack.c.l.b16 %v478
        %v928 = vunpack.c.l.b16 %v479
        %v929 = vunpack.c.h.b16 %v479
        %v930 = vunpack.c.l.b16 %v480
        %v931 = vunpack.c.h.b16 %v480
        %v932 = vunpack.c.l.b16 %v481
        %v933 = vunpack.c.h.b16 %v481
        %v934 = vunpack.c.l.b16 %v482
        %v935 = vunpack.c.l.b16 %v483
        %v936 = vunpack.c.h.b16 %v483
        %v937 = vunpack.c.l.b16 %v484
        %v938 = vunpack.c.h.b16 %v484
        %v939 = vunpack.c.l.b16 %v485
        %v940 = vunpack.c.h.b16 %v485
        %v941 = vunpack.c.l.b16 %v486
        %v942 = vunpack.c.l.b16 %v487
        %v943 = vunpack.c.h.b16 %v487
        %v944 = vunpack.c.l.b16 %v488
        %v945 = vunpack.c.h.b16 %v488
        %v946 = vunpack.c.l.b16 %v489
        %v947 = vunpack.c.h.b16 %v489
        %v948 = vunpack.c.l.b16 %v490
        %v949 = vunpack.c.l.b16 %v491
        %v950 = vunpack.c.h.b16 %v491
        %v951 = vunpack.c.l.b16 %v492
        %v952 = vunpack.c.h.b16 %v492
        %v953 = vunpack.c.l.b16 %v493
        %v954 = vunpack.c.h.b16 %v493
        %v955 = vunpack.c.l.b16 %v494
        %v956 = vunpack.c.l.b16 %v495
        %v957 = vunpack.c.h.b16 %v495
        %v958 = vunpack.c.l.b16 %v496
        %v959 = vunpack.c.h.b16 %v496
        %v960 = vunpack.c.l.b16 %v497
        %v961 = vunpack.c.h.b16 %v497
        %v962 = vunpack.c.l.b16 %v498
        %v963 = vunpack.c.l.b16 %v499
        %v964 = vunpack.c.h.b16 %v499
        %v965 = vunpack.c.l.b16 %v500
        %v966 = vunpack.c.h.b16 %v500
        %v967 = vunpack.c.l.b16 %v501
        %v968 = vunpack.c.h.b16 %v501
        %v969 = vunpack.c.l.b16 %v502
        %v970 = vunpack.c.l.b16 %v503
        %v971 = vunpack.c.h.b16 %v503
        %v972 = vunpack.c.l.b16 %v504
        %v973 = vunpack.c.h.b16 %v504
        %v974 = vunpack.c.l.b16 %v505
        %v975 = vunpack.c.h.b16 %v505
        %v976 = vunpack.c.l.b16 %v506
        %v977 = vunpack.c.l.b16 %v507
        %v978 = vunpack.c.h.b16 %v507
        %v979 = vunpack.c.l.b16 %v508
        %v980 = vunpack.c.h.b16 %v508
        %v981 = vunpack.c.l.b16 %v509
        %v982 = vunpack.c.h.b16 %v509
        %v983 = vunpack.c.l.b16 %v510
        %v984 = vunpack.c.l.b16 %v511
        %v985 = vunpack.c.h.b16 %v511
        %v986 = vunpack.c.l.b16 %v512
        %v987 = vunpack.c.h.b16 %v512
        %v988 = vunpack.c.l.b16 %v513
        %v989 = vunpack.c.h.b16 %v513
        %v990 = vunpack.c.l.b16 %v514
        %v991 = vunpack.c.l.b16 %v515
        %v992 = vunpack.c.h.b16 %v515
        %v993 = vunpack.c.l.b16 %v516
        %v994 = vunpack.c.h.b16 %v516
        %v995 = vunpack.c.l.b16 %v517
        %v996 = vunpack.c.h.b16 %v517
        %v997 = vunpack.c.l.b16 %v518
        %v998 = vunpack.c.l.b16 %v519
        %v999 = vunpack.c.h.b16 %v519
        %v1000 = vunpack.c.l.b16 %v520
        %v1001 = vunpack.c.h.b16 %v520
        %v1002 = vunpack.c.l.b16 %v521
        %v1003 = vunpack.c.h.b16 %v521
        %v1004 = vunpack.c.l.b16 %v522
        %v1005 = vunpack.c.l.b16 %v523
        %v1006 = vunpack.c.h.b16 %v523
        %v1007 = vunpack.c.l.b16 %v524
        %v1008 = vunpack.c.h.b16 %v524
        %v1009 = vunpack.c.l.b16 %v525
        %v1010 = vunpack.c.h.b16 %v525
        %v1011 = vunpack.c.l.b16 %v526
        %v1012 = vunpack.c.l.b16 %v527
        %v1013 = vunpack.c.h.b16 %v527
        %v1014 = vunpack.c.l.b16 %v528
        %v1015 = vunpack.c.h.b16 %v528
        %v1016 = vunpack.c.l.b16 %v529
        %v1017 = vunpack.c.h.b16 %v529
        %v1018 = vunpack.c.l.b16 %v530
        %v1019 = vunpack.c.l.b16 %v531
        %v1020 = vunpack.c.h.b16 %v531
        %v1021 = vunpack.c.l.b16 %v532
        %v1022 = vunpack.c.h.b16 %v532
        %v1023 = vunpack.c.l.b16 %v533
        %v1024 = vunpack.c.h.b16 %v533
        %v1025 = vunpack.c.l.b16 %v534
        %v1026 = vunpack.c.l.b16 %v535
        %v1027 = vunpack.c.h.b16 %v535
        %v1028 = vunpack.c.l.b16 %v536
        %v1029 = vunpack.c.h.b16 %v536
        %v1030 = vunpack.c.l.b16 %v537
        %v1031 = vunpack.c.h.b16 %v537
        %v1032 = vunpack.c.l.b16 %v538
        %v1033 = vunpack.c.l.b16 %v539
        %v1034 = vunpack.c.h.b16 %v539
        %v1035 = vunpack.c.l.b16 %v540
        %v1036 = vunpack.c.h.b16 %v540
        %v1037 = vunpack.c.l.b16 %v541
        %v1038 = vunpack.c.h.b16 %v541
        %v1039 = vunpack.c.l.b16 %v542
        %v1040 = vunpack.c.l.b16 %v543
        %v1041 = vunpack.c.h.b16 %v543
        %v1042 = vunpack.c.l.b16 %v544
        %v1043 = vunpack.c.h.b16 %v544
        %v1044 = vunpack.c.l.b16 %v545
        %v1045 = vunpack.c.h.b16 %v545
        %v1046 = vunpack.c.l.b16 %v546
        %v1047 = vunpack.c.l.b16 %v547
        %v1048 = vunpack.c.h.b16 %v547
        %v1049 = vunpack.c.l.b16 %v548
        %v1050 = vunpack.c.h.b16 %v548
        %v1051 = vunpack.c.l.b16 %v549
        %v1052 = vunpack.c.h.b16 %v549
        %v1053 = vunpack.c.l.b16 %v550
        %v1054 = vunpack.c.l.b16 %v551
        %v1055 = vunpack.c.h.b16 %v551
        %v1056 = vunpack.c.l.b16 %v552
        %v1057 = vunpack.c.h.b16 %v552
        %v1058 = vunpack.c.l.b16 %v553
        %v1059 = vunpack.c.h.b16 %v553
        %v1060 = vunpack.c.l.b16 %v554
        %v1061 = vunpack.c.l.b16 %v555
        %v1062 = vunpack.c.h.b16 %v555
        %v1063 = vunpack.c.l.b16 %v556
        %v1064 = vunpack.c.h.b16 %v556
        %v1065 = vunpack.c.l.b16 %v557
        %v1066 = vunpack.c.h.b16 %v557
        %v1067 = vunpack.c.l.b16 %v558
        %v1068 = vunpack.c.l.b16 %v559
        %v1069 = vunpack.c.h.b16 %v559
        %v1070 = vunpack.c.l.b16 %v560
        %v1071 = vunpack.c.h.b16 %v560
        %v1072 = vunpack.c.l.b16 %v561
        %v1073 = vunpack.c.h.b16 %v561
        %v1074 = vunpack.c.l.b16 %v562
        %v1075 = vunpack.c.l.b16 %v563
        %v1076 = vunpack.c.h.b16 %v563
        %v1077 = vunpack.c.l.b16 %v564
        %v1078 = vunpack.c.h.b16 %v564
        %v1079 = vunpack.c.l.b16 %v565
        %v1080 = vunpack.c.h.b16 %v565
        %v1081 = vunpack.c.l.b16 %v566
        %v1082 = vunpack.c.l.b16 %v567
        %v1083 = vunpack.c.h.b16 %v567
        %v1084 = vunpack.c.l.b16 %v568
        %v1085 = vunpack.c.h.b16 %v568
        %v1086 = vunpack.c.l.b16 %v569
        %v1087 = vunpack.c.h.b16 %v569
        %v1088 = vunpack.c.l.b16 %v570
        %v1089 = vunpack.c.l.b16 %v571
        %v1090 = vunpack.c.h.b16 %v571
        %v1091 = vunpack.c.l.b16 %v572
        %v1092 = vunpack.c.h.b16 %v572
        %v1093 = vunpack.c.l.b16 %v573
        %v1094 = vunpack.c.h.b16 %v573
        %v1095 = vunpack.c.l.b16 %v574
        %v1096 = vunpack.c.l.b16 %v575
        %v1097 = vunpack.c.h.b16 %v575
        %v1098 = vunpack.c.l.b16 %v576
        %v1099 = vunpack.c.h.b16 %v576
        %v1100 = vunpack.c.l.b16 %v577
        %v1101 = vunpack.c.h.b16 %v577
        %v1102 = vunpack.c.l.b16 %v578
        %v1103 = vunpack.c.l.b16 %v579
        %v1104 = vunpack.c.h.b16 %v579
        %v1105 = vunpack.c.l.b16 %v580
        %v1106 = vunpack.c.h.b16 %v580
        %v1107 = vunpack.c.l.b16 %v581
        %v1108 = vunpack.c.h.b16 %v581
        %v1109 = vunpack.c.l.b16 %v582
        %v1110 = vunpack.c.l.b16 %v583
        %v1111 = vunpack.c.h.b16 %v583
        %v1112 = vunpack.c.l.b16 %v584
        %v1113 = vunpack.c.h.b16 %v584
        %v1114 = vunpack.c.l.b16 %v585
        %v1115 = vunpack.c.h.b16 %v585
        %v1116 = vunpack.c.l.b16 %v586
        %v1117 = vunpack.c.l.b16 %v587
        %v1118 = vunpack.c.h.b16 %v587
        %v1119 = vunpack.c.l.b16 %v588
        %v1120 = vunpack.c.h.b16 %v588
        %v1121 = vunpack.c.l.b16 %v589
        %v1122 = vunpack.c.h.b16 %v589
        %v1123 = vunpack.c.l.b16 %v590
        %v1124 = vunpack.c.l.b16 %v591
        %v1125 = vunpack.c.h.b16 %v591
        %v1126 = vunpack.c.l.b16 %v592
        %v1127 = vunpack.c.h.b16 %v592
        %v1128 = vunpack.c.l.b16 %v593
        %v1129 = vunpack.c.h.b16 %v593
        %v1130 = vunpack.c.l.b16 %v594
        %v1131 = vunpack.c.l.b16 %v595
        %v1132 = vunpack.c.h.b16 %v595
        %v1133 = vunpack.c.l.b16 %v596
        %v1134 = vunpack.c.h.b16 %v596
        %v1135 = vunpack.c.l.b16 %v597
        %v1136 = vunpack.c.h.b16 %v597
        %v1137 = vunpack.c.l.b16 %v598
        %v1138 = vunpack.c.l.b16 %v599
        %v1139 = vunpack.c.h.b16 %v599
        %v1140 = vunpack.c.l.b16 %v600
        %v1141 = vunpack.c.h.b16 %v600
        %v1142 = vunpack.c.l.b16 %v601
        %v1143 = vunpack.c.h.b16 %v601
        %v1144 = vunpack.c.l.b16 %v602
        %v1145 = vunpack.c.l.b16 %v603
        %v1146 = vunpack.c.h.b16 %v603
        %v1147 = vunpack.c.l.b16 %v604
        %v1148 = vunpack.c.h.b16 %v604
        %v1149 = vunpack.c.l.b16 %v605
        %v1150 = vunpack.c.h.b16 %v605
        %v1151 = vunpack.c.l.b16 %v606
        %v1152 = vunpack.c.l.b16 %v607
        %v1153 = vunpack.c.h.b16 %v607
        %v1154 = vunpack.c.l.b16 %v608
        %v1155 = vunpack.c.h.b16 %v608
        %v1156 = vunpack.c.l.b16 %v609
        %v1157 = vunpack.c.h.b16 %v609
        %v1158 = vunpack.c.l.b16 %v610
        %v1159 = vunpack.c.l.b16 %v611
        %v1160 = vunpack.c.h.b16 %v611
        %v1161 = vunpack.c.l.b16 %v612
        %v1162 = vunpack.c.h.b16 %v612
        %v1163 = vunpack.c.l.b16 %v613
        %v1164 = vunpack.c.h.b16 %v613
        %v1165 = vunpack.c.l.b16 %v614
        %v1166 = vunpack.c.l.b16 %v615
        %v1167 = vunpack.c.h.b16 %v615
        %v1168 = vunpack.c.l.b16 %v616
        %v1169 = vunpack.c.h.b16 %v616
        %v1170 = vunpack.c.l.b16 %v617
        %v1171 = vunpack.c.h.b16 %v617
        %v1172 = vunpack.c.l.b16 %v618
        %v1173 = vunpack.c.l.b16 %v619
        %v1174 = vunpack.c.h.b16 %v619
        %v1175 = vunpack.c.l.b16 %v620
        %v1176 = vunpack.c.h.b16 %v620
        %v1177 = vunpack.c.l.b16 %v621
        %v1178 = vunpack.c.h.b16 %v621
        %v1179 = vunpack.c.l.b16 %v622
        %v1180 = vunpack.c.l.b16 %v623
        %v1181 = vunpack.c.h.b16 %v623
        %v1182 = vunpack.c.l.b16 %v624
        %v1183 = vunpack.c.h.b16 %v624
        %v1184 = vunpack.c.l.b16 %v625
        %v1185 = vunpack.c.h.b16 %v625
        %v1186 = vunpack.c.l.b16 %v626
        %v1187 = vunpack.c.l.b16 %v627
        %v1188 = vunpack.c.h.b16 %v627
        %v1189 = vunpack.c.l.b16 %v628
        %v1190 = vunpack.c.h.b16 %v628
        %v1191 = vunpack.c.l.b16 %v629
        %v1192 = vunpack.c.h.b16 %v629
        %v1193 = vunpack.c.l.b16 %v630
        %v1194 = vunpack.c.l.b16 %v631
        %v1195 = vunpack.c.h.b16 %v631
        %v1196 = vunpack.c.l.b16 %v632
        %v1197 = vunpack.c.h.b16 %v632
        %v1198 = vunpack.c.l.b16 %v633
        %v1199 = vunpack.c.h.b16 %v633
        %v1200 = vunpack.c.l.b16 %v634
        %v1201 = vunpack.c.l.b16 %v635
        %v1202 = vunpack.c.h.b16 %v635
        %v1203 = vunpack.c.l.b16 %v636
        %v1204 = vunpack.c.h.b16 %v636
        %v1205 = vunpack.c.l.b16 %v637
        %v1206 = vunpack.c.h.b16 %v637
        %v1207 = vunpack.c.l.b16 %v638
        %v1208 = vunpack.c.l.b16 %v639
        %v1209 = vunpack.c.h.b16 %v639
        %v1210 = vunpack.c.l.b16 %v640
        %v1211 = vunpack.c.h.b16 %v640
        %v1212 = vunpack.c.l.b16 %v641
        %v1213 = vunpack.c.h.b16 %v641
        %v1214 = vunpack.c.l.b16 %v642
        %v1215 = vunpack.c.l.b16 %v643
        %v1216 = vunpack.c.h.b16 %v643
        %v1217 = vunpack.c.l.b16 %v644
        %v1218 = vunpack.c.h.b16 %v644
        %v1219 = vunpack.c.l.b16 %v645
        %v1220 = vunpack.c.h.b16 %v645
        %v1221 = vunpack.c.l.b16 %v646
        %v1222 = vunpack.c.l.b16 %v647
        %v1223 = vunpack.c.h.b16 %v647
        %v1224 = vunpack.c.l.b16 %v648
        %v1225 = vunpack.c.h.b16 %v648
        %v1226 = vunpack.c.l.b16 %v649
        %v1227 = vunpack.c.h.b16 %v649
        %v1228 = vunpack.c.l.b16 %v650
        %v1229 = vunpack.c.l.b16 %v651
        %v1230 = vunpack.c.h.b16 %v651
        %v1231 = vunpack.c.l.b16 %v652
        %v1232 = vunpack.c.h.b16 %v652
        %v1233 = vunpack.c.l.b16 %v653
        %v1234 = vunpack.c.h.b16 %v653
        %v1235 = vunpack.c.l.b16 %v654
        %v1236 = vunpack.c.l.b16 %v655
        %v1237 = vunpack.c.h.b16 %v655
        %v1238 = vunpack.c.l.b16 %v656
        %v1239 = vunpack.c.h.b16 %v656
        %v1240 = vunpack.c.l.b16 %v657
        %v1241 = vunpack.c.h.b16 %v657
        %v1242 = vunpack.c.l.b16 %v658
        %v1243 = vunpack.c.l.b16 %v659
        %v1244 = vunpack.c.h.b16 %v659
        %v1245 = vunpack.c.l.b16 %v660
        %v1246 = vunpack.c.h.b16 %v660
        %v1247 = vunpack.c.l.b16 %v661
        %v1248 = vunpack.c.h.b16 %v661
        %v1249 = vunpack.c.l.b16 %v662
        %v1250 = vpack.c.b16 %v907, %v900
        %v1251 = vpack.c.b16 %v908, %v901
        %v1252 = vpack.c.b16 %v909, %v902
        %v1253 = vpack.c.b16 %v910, %v903
        %v1254 = vpack.c.b16 %v911, %v904
        %v1255 = vpack.c.b16 %v912, %v905
        %v1256 = vpack.c.b16 %v913, %v906
        %v1257 = vpack.c.b16 %v921, %v914
        %v1258 = vpack.c.b16 %v922, %v915
        %v1259 = vpack.c.b16 %v923, %v916
        %v1260 = vpack.c.b16 %v924, %v917
        %v1261 = vpack.c.b16 %v925, %v918
        %v1262 = vpack.c.b16 %v926, %v919
        %v1263 = vpack.c.b16 %v927, %v920
        %v1264 = vpack.c.b16 %v935, %v928
        %v1265 = vpack.c.b16 %v936, %v929
        %v1266 = vpack.c.b16 %v937, %v930
        %v1267 = vpack.c.b16 %v938, %v931
        %v1268 = vpack.c.b16 %v939, %v932
        %v1269 = vpack.c.b16 %v940, %v933
        %v1270 = vpack.c.b16 %v941, %v934
        %v1271 = vpack.c.b16 %v949, %v942
        %v1272 = vpack.c.b16 %v950, %v943
        %v1273 = vpack.c.b16 %v951, %v944
        %v1274 = vpack.c.b16 %v952, %v945
        %v1275 = vpack.c.b16 %v953, %v946
        %v1276 = vpack.c.b16 %v954, %v947
        %v1277 = vpack.c.b16 %v955, %v948
        %v1278 = vpack.c.b16 %v963, %v956
        %v1279 = vpack.c.b16 %v964, %v957
        %v1280 = vpack.c.b16 %v965, %v958
        %v1281 = vpack.c.b16 %v966, %v959
        %v1282 = vpack.c.b16 %v967, %v960
        %v1283 = vpack.c.b16 %v968, %v961
        %v1284 = vpack.c.b16 %v969, %v962
        %v1285 = vpack.c.b16 %v977, %v970
        %v1286 = vpack.c.b16 %v978, %v971
        %v1287 = vpack.c.b16 %v979, %v972
        %v1288 = vpack.c.b16 %v980, %v973
        %v1289 = vpack.c.b16 %v981, %v974
        %v1290 = vpack.c.b16 %v982, %v975
        %v1291 = vpack.c.b16 %v983, %v976
        %v1292 = vpack.c.b16 %v991, %v984
        %v1293 = vpack.c.b16 %v992, %v985
        %v1294 = vpack.c.b16 %v993, %v986
        %v1295 = vpack.c.b16 %v994, %v987
        %v1296 = vpack.c.b16 %v995, %v988
        %v1297 = vpack.c.b16 %v996, %v989
        %v1298 = vpack.c.b16 %v997, %v990
        %v1299 = vpack.c.b16 %v1005, %v998
        %v1300 = vpack.c.b16 %v1006, %v999
        %v1301 = vpack.c.b16 %v1007, %v1000
        %v1302 = vpack.c.b16 %v1008, %v1001
        %v1303 = vpack.c.b16 %v1009, %v1002
        %v1304 = vpack.c.b16 %v1010, %v1003
        %v1305 = vpack.c.b16 %v1011, %v1004
        %v1306 = vpack.c.b16 %v1019, %v1012
        %v1307 = vpack.c.b16 %v1020, %v1013
        %v1308 = vpack.c.b16 %v1021, %v1014
        %v1309 = vpack.c.b16 %v1022, %v1015
        %v1310 = vpack.c.b16 %v1023, %v1016
        %v1311 = vpack.c.b16 %v1024, %v1017
        %v1312 = vpack.c.b16 %v1025, %v1018
        %v1313 = vpack.c.b16 %v1033, %v1026
        %v1314 = vpack.c.b16 %v1034, %v1027
        %v1315 = vpack.c.b16 %v1035, %v1028
        %v1316 = vpack.c.b16 %v1036, %v1029
        %v1317 = vpack.c.b16 %v1037, %v1030
        %v1318 = vpack.c.b16 %v1038, %v1031
        %v1319 = vpack.c.b16 %v1039, %v1032
        %v1320 = vpack.c.b16 %v1047, %v1040
        %v1321 = vpack.c.b16 %v1048, %v1041
        %v1322 = vpack.c.b16 %v1049, %v1042
        %v1323 = vpack.c.b16 %v1050, %v1043
        %v1324 = vpack.c.b16 %v1051, %v1044
        %v1325 = vpack.c.b16 %v1052, %v1045
        %v1326 = vpack.c.b16 %v1053, %v1046
        %v1327 = vpack.c.b16 %v1061, %v1054
        %v1328 = vpack.c.b16 %v1062, %v1055
        %v1329 = vpack.c.b16 %v1063, %v1056
        %v1330 = vpack.c.b16 %v1064, %v1057
        %v1331 = vpack.c.b16 %v1065, %v1058
        %v1332 = vpack.c.b16 %v1066, %v1059
        %v1333 = vpack.c.b16 %v1067, %v1060
        %v1334 = vpack.c.b16 %v1075, %v1068
        %v1335 = vpack.c.b16 %v1076, %v1069
        %v1336 = vpack.c.b16 %v1077, %v1070
        %v1337 = vpack.c.b16 %v1078, %v1071
        %v1338 = vpack.c.b16 %v1079, %v1072
        %v1339 = vpack.c.b16 %v1080, %v1073
        %v1340 = vpack.c.b16 %v1081, %v1074
        %v1341 = vpack.c.b16 %v1089, %v1082
        %v1342 = vpack.c.b16 %v1090, %v1083
        %v1343 = vpack.c.b16 %v1091, %v1084
        %v1344 = vpack.c.b16 %v1092, %v1085
        %v1345 = vpack.c.b16 %v1093, %v1086
        %v1346 = vpack.c.b16 %v1094, %v1087
        %v1347 = vpack.c.b16 %v1095, %v1088
        %v1348 = vpack.c.b16 %v1103, %v1096
        %v1349 = vpack.c.b16 %v1104, %v1097
        %v1350 = vpack.c.b16 %v1105, %v1098
        %v1351 = vpack.c.b16 %v1106, %v1099
        %v1352 = vpack.c.b16 %v1107, %v1100
        %v1353 = vpack.c.b16 %v1108, %v1101
        %v1354 = vpack.c.b16 %v1109, %v1102
        %v1355 = vpack.c.b16 %v1117, %v1110
        %v1356 = vpack.c.b16 %v1118, %v1111
        %v1357 = vpack.c.b16 %v1119, %v1112
        %v1358 = vpack.c.b16 %v1120, %v1113
        %v1359 = vpack.c.b16 %v1121, %v1114
        %v1360 = vpack.c.b16 %v1122, %v1115
        %v1361 = vpack.c.b16 %v1123, %v1116
        %v1362 = vpack.c.b16 %v1131, %v1124
        %v1363 = vpack.c.b16 %v1132, %v1125
        %v1364 = vpack.c.b16 %v1133, %v1126
        %v1365 = vpack.c.b16 %v1134, %v1127
        %v1366 = vpack.c.b16 %v1135, %v1128
        %v1367 = vpack.c.b16 %v1136, %v1129
        %v1368 = vpack.c.b16 %v1137, %v1130
        %v1369 = vpack.c.b16 %v1145, %v1138
        %v1370 = vpack.c.b16 %v1146, %v1139
        %v1371 = vpack.c.b16 %v1147, %v1140
        %v1372 = vpack.c.b16 %v1148, %v1141
        %v1373 = vpack.c.b16 %v1149, %v1142
        %v1374 = vpack.c.b16 %v1150, %v1143
        %v1375 = vpack.c.b16 %v1151, %v1144
        %v1376 = vpack.c.b16 %v1159, %v1152
        %v1377 = vpack.c.b16 %v1160, %v1153
        %v1378 = vpack.c.b16 %v1161, %v1154
        %v1379 = vpack.c.b16 %v1162, %v1155
        %v1380 = vpack.c.b16 %v1163, %v1156
        %v1381 = vpack.c.b16 %v1164, %v1157
        %v1382 = vpack.c.b16 %v1165, %v1158
        %v1383 = vpack.c.b16 %v1173, %v1166
        %v1384 = vpack.c.b16 %v1174, %v1167
        %v1385 = vpack.c.b16 %v1175, %v1168
        %v1386 = vpack.c.b16 %v1176, %v1169
        %v1387 = vpack.c.b16 %v1177, %v1170
        %v1388 = vpack.c.b16 %v1178, %v1171
        %v1389 = vpack.c.b16 %v1179, %v1172
        %v1390 = vpack.c.b16 %v1187, %v1180
        %v1391 = vpack.c.b16 %v1188, %v1181
        %v1392 = vpack.c.b16 %v1189, %v1182
        %v1393 = vpack.c.b16 %v1190, %v1183
        %v1394 = vpack.c.b16 %v1191, %v1184
        %v1395 = vpack.c.b16 %v1192, %v1185
        %v1396 = vpack.c.b16 %v1193, %v1186
        %v1397 = vpack.c.b16 %v1201, %v1194
        %v1398 = vpack.c.b16 %v1202, %v1195
        %v1399 = vpack.c.b16 %v1203, %v1196
        %v1400 = vpack.c.b16 %v1204, %v1197
        %v1401 = vpack.c.b16 %v1205, %v1198
        %v1402 = vpack.c.b16 %v1206, %v1199
        %v1403 = vpack.c.b16 %v1207, %v1200
        %v1404 = vpack.c.b16 %v1215, %v1208
        %v1405 = vpack.c.b16 %v1216, %v1209
        %v1406 = vpack.c.b16 %v1217, %v1210
        %v1407 = vpack.c.b16 %v1218, %v1211
        %v1408 = vpack.c.b16 %v1219, %v1212
        %v1409 = vpack.c.b16 %v1220, %v1213
        %v1410 = vpack.c.b16 %v1221, %v1214
        %v1411 = vpack.c.b16 %v1229, %v1222
        %v1412 = vpack.c.b16 %v1230, %v1223
        %v1413 = vpack.c.b16 %v1231, %v1224
        %v1414 = vpack.c.b16 %v1232, %v1225
        %v1415 = vpack.c.b16 %v1233, %v1226
        %v1416 = vpack.c.b16 %v1234, %v1227
        %v1417 = vpack.c.b16 %v1235, %v1228
        %v1418 = vpack.c.b16 %v1243, %v1236
        %v1419 = vpack.c.b16 %v1244, %v1237
        %v1420 = vpack.c.b16 %v1245, %v1238
        %v1421 = vpack.c.b16 %v1246, %v1239
        %v1422 = vpack.c.b16 %v1247, %v1240
        %v1423 = vpack.c.b16 %v1248, %v1241
        %v1424 = vpack.c.b16 %v1249, %v1242
        %vm1600 = vcmask 130048
        %v1602 = vsel %vm1600, %v462, 0
        %1604 = vmatprep.subr.bf16.mxu0 %v1300
        %1605 = vmatpush1.bf16.msra.mxu0 %v1299
        %1606 = vmatprep.subr.bf16.mxu0 %v1293
        %1607 = vmatpush1.bf16.msra.mxu0 %v1292
        %1608 = vmatprep.subr.bf16.mxu0 %v1286
        %1609 = vmatpush1.bf16.msra.mxu0 %v1285
        %1610 = vmatprep.subr.bf16.mxu0 %v1279
        %1611 = vmatpush1.bf16.msra.mxu0 %v1278
        %1612 = vmatprep.subr.bf16.mxu0 %v1272
        %1613 = vmatpush1.bf16.msra.mxu0 %v1271
        %1614 = vmatprep.subr.bf16.mxu0 %v1265
        %1615 = vmatpush1.bf16.msra.mxu0 %v1264
        %1616 = vmatprep.subr.bf16.mxu0 %v1258
        %1617 = vmatpush1.bf16.msra.mxu0 %v1257
        %1618 = vmatprep.subr.bf16.mxu0 %v1251
        %1619 = vmatpush1.bf16.msra.mxu0 %v1250
        %1620 = vmatprep.subr.bf16.mxu0 %v1356
        %1621 = vmatpush2.bf16.msra.mxu0 %v1355
        %1622 = vmatprep.subr.bf16.mxu0 %v1349
        %1623 = vmatpush2.bf16.msra.mxu0 %v1348
        %1624 = vmatprep.subr.bf16.mxu0 %v1342
        %1625 = vmatpush2.bf16.msra.mxu0 %v1341
        %1626 = vmatprep.subr.bf16.mxu0 %v1335
        %1627 = vmatpush2.bf16.msra.mxu0 %v1334
        %1628 = vmatprep.subr.bf16.mxu0 %v1328
        %1629 = vmatpush2.bf16.msra.mxu0 %v1327
        %1630 = vmatprep.subr.bf16.mxu0 %v1321
        %1631 = vmatpush2.bf16.msra.mxu0 %v1320
        %1632 = vmatprep.subr.bf16.mxu0 %v1314
        %1633 = vmatpush2.bf16.msra.mxu0 %v1313
        %1634 = vmatprep.subr.bf16.mxu0 %v1307
        %1635 = vmatpush2.bf16.msra.mxu0 %v1306
        %1636 = vmatprep.mubr.bf16.mxu0 %v460
        %1637 = vmatmul.mubr.bf16.gmra.mxu0 %v459
        %v1638 = vpop.f32.mrf.mxu0
        %v1639 = vadd.f32 %v668, %v1638
        %v1640 = vpop.f32.mrf.mxu0
        %v1641 = vadd.f32 %v672, %v1640
        %v1642 = vpop.f32.mrf.mxu0
        %v1643 = vadd.f32 %v668, %v1642
        %v1644 = vpop.f32.mrf.mxu0
        %v1645 = vadd.f32 %v672, %v1644
        %1646 = vdwg.mxu0
        %1647 = vmatprep.subr.bf16.mxu0 %v1412
        %1648 = vmatpush1.bf16.msra.mxu0 %v1411
        %1649 = vmatprep.subr.bf16.mxu0 %v1405
        %1650 = vmatpush1.bf16.msra.mxu0 %v1404
        %1651 = vmatprep.subr.bf16.mxu0 %v1398
        %1652 = vmatpush1.bf16.msra.mxu0 %v1397
        %1653 = vmatprep.subr.bf16.mxu0 %v1391
        %1654 = vmatpush1.bf16.msra.mxu0 %v1390
        %1655 = vmatprep.subr.bf16.mxu0 %v1384
        %1656 = vmatpush1.bf16.msra.mxu0 %v1383
        %1657 = vmatprep.subr.bf16.mxu0 %v1377
        %1658 = vmatpush1.bf16.msra.mxu0 %v1376
        %1659 = vmatprep.subr.bf16.mxu0 %v1370
        %1660 = vmatpush1.bf16.msra.mxu0 %v1369
        %1661 = vmatprep.subr.bf16.mxu0 %v1363
        %1662 = vmatpush1.bf16.msra.mxu0 %v1362
        %1663 = vmatprep.subr.bf16.mxu0 0
        %1664 = vmatpush2.bf16.msra.mxu0 0
        %1665 = vmatprep.subr.bf16.mxu0 0
        %1666 = vmatpush2.bf16.msra.mxu0 0
        %1667 = vmatprep.subr.bf16.mxu0 0
        %1668 = vmatpush2.bf16.msra.mxu0 0
        %1669 = vmatprep.subr.bf16.mxu0 0
        %1670 = vmatpush2.bf16.msra.mxu0 0
        %1671 = vmatprep.subr.bf16.mxu0 0
        %1672 = vmatpush2.bf16.msra.mxu0 0
        %1673 = vmatprep.subr.bf16.mxu0 0
        %1674 = vmatpush2.bf16.msra.mxu0 0
        %1675 = vmatprep.subr.bf16.mxu0 0
        %1676 = vmatpush2.bf16.msra.mxu0 0
        %1677 = vmatprep.subr.bf16.mxu0 %v1419
        %1678 = vmatpush2.bf16.msra.mxu0 %v1418
        %1679 = vmatprep.mubr.bf16.mxu0 %v1602
        %1680 = vmatmul.mubr.bf16.gmra.mxu0 %v461
        %v1681 = vpop.f32.mrf.mxu0
        %v1682 = vadd.f32 %v1639, %v1681
        %v1683 = vpop.f32.mrf.mxu0
        %v1684 = vadd.f32 %v1641, %v1683
        %v1685 = vpop.f32.mrf.mxu0
        %v1686 = vadd.f32 %v1643, %v1685
        %v1687 = vpop.f32.mrf.mxu0
        %v1688 = vadd.f32 %v1645, %v1687
        %1689 = vdwg.mxu0
        %1690 = vmatprep.subr.bf16.mxu0 %v1302
        %1691 = vmatpush1.bf16.msra.mxu0 %v1301
        %1692 = vmatprep.subr.bf16.mxu0 %v1295
        %1693 = vmatpush1.bf16.msra.mxu0 %v1294
        %1694 = vmatprep.subr.bf16.mxu0 %v1288
        %1695 = vmatpush1.bf16.msra.mxu0 %v1287
        %1696 = vmatprep.subr.bf16.mxu0 %v1281
        %1697 = vmatpush1.bf16.msra.mxu0 %v1280
        %1698 = vmatprep.subr.bf16.mxu0 %v1274
        %1699 = vmatpush1.bf16.msra.mxu0 %v1273
        %1700 = vmatprep.subr.bf16.mxu0 %v1267
        %1701 = vmatpush1.bf16.msra.mxu0 %v1266
        %1702 = vmatprep.subr.bf16.mxu0 %v1260
        %1703 = vmatpush1.bf16.msra.mxu0 %v1259
        %1704 = vmatprep.subr.bf16.mxu0 %v1253
        %1705 = vmatpush1.bf16.msra.mxu0 %v1252
        %1706 = vmatprep.subr.bf16.mxu0 %v1358
        %1707 = vmatpush2.bf16.msra.mxu0 %v1357
        %1708 = vmatprep.subr.bf16.mxu0 %v1351
        %1709 = vmatpush2.bf16.msra.mxu0 %v1350
        %1710 = vmatprep.subr.bf16.mxu0 %v1344
        %1711 = vmatpush2.bf16.msra.mxu0 %v1343
        %1712 = vmatprep.subr.bf16.mxu0 %v1337
        %1713 = vmatpush2.bf16.msra.mxu0 %v1336
        %1714 = vmatprep.subr.bf16.mxu0 %v1330
        %1715 = vmatpush2.bf16.msra.mxu0 %v1329
        %1716 = vmatprep.subr.bf16.mxu0 %v1323
        %1717 = vmatpush2.bf16.msra.mxu0 %v1322
        %1718 = vmatprep.subr.bf16.mxu0 %v1316
        %1719 = vmatpush2.bf16.msra.mxu0 %v1315
        %1720 = vmatprep.subr.bf16.mxu0 %v1309
        %1721 = vmatpush2.bf16.msra.mxu0 %v1308
        %1722 = vmatprep.mubr.bf16.mxu0 %v460
        %1723 = vmatmul.mubr.bf16.gmra.mxu0 %v459
        %v1724 = vpop.f32.mrf.mxu0
        %v1725 = vadd.f32 %v676, %v1724
        %v1726 = vpop.f32.mrf.mxu0
        %v1727 = vadd.f32 %v680, %v1726
        %v1728 = vpop.f32.mrf.mxu0
        %v1729 = vadd.f32 %v676, %v1728
        %v1730 = vpop.f32.mrf.mxu0
        %v1731 = vadd.f32 %v680, %v1730
        %1732 = vdwg.mxu0
        %1733 = vmatprep.subr.bf16.mxu0 %v1414
        %1734 = vmatpush1.bf16.msra.mxu0 %v1413
        %1735 = vmatprep.subr.bf16.mxu0 %v1407
        %1736 = vmatpush1.bf16.msra.mxu0 %v1406
        %1737 = vmatprep.subr.bf16.mxu0 %v1400
        %1738 = vmatpush1.bf16.msra.mxu0 %v1399
        %1739 = vmatprep.subr.bf16.mxu0 %v1393
        %1740 = vmatpush1.bf16.msra.mxu0 %v1392
        %1741 = vmatprep.subr.bf16.mxu0 %v1386
        %1742 = vmatpush1.bf16.msra.mxu0 %v1385
        %1743 = vmatprep.subr.bf16.mxu0 %v1379
        %1744 = vmatpush1.bf16.msra.mxu0 %v1378
        %1745 = vmatprep.subr.bf16.mxu0 %v1372
        %1746 = vmatpush1.bf16.msra.mxu0 %v1371
        %1747 = vmatprep.subr.bf16.mxu0 %v1365
        %1748 = vmatpush1.bf16.msra.mxu0 %v1364
        %1749 = vmatprep.subr.bf16.mxu0 0
        %1750 = vmatpush2.bf16.msra.mxu0 0
        %1751 = vmatprep.subr.bf16.mxu0 0
        %1752 = vmatpush2.bf16.msra.mxu0 0
        %1753 = vmatprep.subr.bf16.mxu0 0
        %1754 = vmatpush2.bf16.msra.mxu0 0
        %1755 = vmatprep.subr.bf16.mxu0 0
        %1756 = vmatpush2.bf16.msra.mxu0 0
        %1757 = vmatprep.subr.bf16.mxu0 0
        %1758 = vmatpush2.bf16.msra.mxu0 0
        %1759 = vmatprep.subr.bf16.mxu0 0
        %1760 = vmatpush2.bf16.msra.mxu0 0
        %1761 = vmatprep.subr.bf16.mxu0 0
        %1762 = vmatpush2.bf16.msra.mxu0 0
        %1763 = vmatprep.subr.bf16.mxu0 %v1421
        %1764 = vmatpush2.bf16.msra.mxu0 %v1420
        %1765 = vmatprep.mubr.bf16.mxu0 %v1602
        %1766 = vmatmul.mubr.bf16.gmra.mxu0 %v461
        %v1767 = vpop.f32.mrf.mxu0
        %v1768 = vadd.f32 %v1725, %v1767
        %v1769 = vpop.f32.mrf.mxu0
        %v1770 = vadd.f32 %v1727, %v1769
        %v1771 = vpop.f32.mrf.mxu0
        %v1772 = vadd.f32 %v1729, %v1771
        %v1773 = vpop.f32.mrf.mxu0
        %v1774 = vadd.f32 %v1731, %v1773
        %1775 = vdwg.mxu0
        %1776 = vmatprep.subr.bf16.mxu0 %v1304
        %1777 = vmatpush1.bf16.msra.mxu0 %v1303
        %1778 = vmatprep.subr.bf16.mxu0 %v1297
        %1779 = vmatpush1.bf16.msra.mxu0 %v1296
        %1780 = vmatprep.subr.bf16.mxu0 %v1290
        %1781 = vmatpush1.bf16.msra.mxu0 %v1289
        %1782 = vmatprep.subr.bf16.mxu0 %v1283
        %1783 = vmatpush1.bf16.msra.mxu0 %v1282
        %1784 = vmatprep.subr.bf16.mxu0 %v1276
        %1785 = vmatpush1.bf16.msra.mxu0 %v1275
        %1786 = vmatprep.subr.bf16.mxu0 %v1269
        %1787 = vmatpush1.bf16.msra.mxu0 %v1268
        %1788 = vmatprep.subr.bf16.mxu0 %v1262
        %1789 = vmatpush1.bf16.msra.mxu0 %v1261
        %1790 = vmatprep.subr.bf16.mxu0 %v1255
        %1791 = vmatpush1.bf16.msra.mxu0 %v1254
        %1792 = vmatprep.subr.bf16.mxu0 %v1360
        %1793 = vmatpush2.bf16.msra.mxu0 %v1359
        %1794 = vmatprep.subr.bf16.mxu0 %v1353
        %1795 = vmatpush2.bf16.msra.mxu0 %v1352
        %1796 = vmatprep.subr.bf16.mxu0 %v1346
        %1797 = vmatpush2.bf16.msra.mxu0 %v1345
        %1798 = vmatprep.subr.bf16.mxu0 %v1339
        %1799 = vmatpush2.bf16.msra.mxu0 %v1338
        %1800 = vmatprep.subr.bf16.mxu0 %v1332
        %1801 = vmatpush2.bf16.msra.mxu0 %v1331
        %1802 = vmatprep.subr.bf16.mxu0 %v1325
        %1803 = vmatpush2.bf16.msra.mxu0 %v1324
        %1804 = vmatprep.subr.bf16.mxu0 %v1318
        %1805 = vmatpush2.bf16.msra.mxu0 %v1317
        %1806 = vmatprep.subr.bf16.mxu0 %v1311
        %1807 = vmatpush2.bf16.msra.mxu0 %v1310
        %1808 = vmatprep.mubr.bf16.mxu0 %v460
        %1809 = vmatmul.mubr.bf16.gmra.mxu0 %v459
        %v1810 = vpop.f32.mrf.mxu0
        %v1811 = vadd.f32 %v684, %v1810
        %v1812 = vpop.f32.mrf.mxu0
        %v1813 = vadd.f32 %v688, %v1812
        %v1814 = vpop.f32.mrf.mxu0
        %v1815 = vadd.f32 %v684, %v1814
        %v1816 = vpop.f32.mrf.mxu0
        %v1817 = vadd.f32 %v688, %v1816
        %1818 = vdwg.mxu0
        %1819 = vmatprep.subr.bf16.mxu0 %v1416
        %1820 = vmatpush1.bf16.msra.mxu0 %v1415
        %1821 = vmatprep.subr.bf16.mxu0 %v1409
        %1822 = vmatpush1.bf16.msra.mxu0 %v1408
        %1823 = vmatprep.subr.bf16.mxu0 %v1402
        %1824 = vmatpush1.bf16.msra.mxu0 %v1401
        %1825 = vmatprep.subr.bf16.mxu0 %v1395
        %1826 = vmatpush1.bf16.msra.mxu0 %v1394
        %1827 = vmatprep.subr.bf16.mxu0 %v1388
        %1828 = vmatpush1.bf16.msra.mxu0 %v1387
        %1829 = vmatprep.subr.bf16.mxu0 %v1381
        %1830 = vmatpush1.bf16.msra.mxu0 %v1380
        %1831 = vmatprep.subr.bf16.mxu0 %v1374
        %1832 = vmatpush1.bf16.msra.mxu0 %v1373
        %1833 = vmatprep.subr.bf16.mxu0 %v1367
        %1834 = vmatpush1.bf16.msra.mxu0 %v1366
        %1835 = vmatprep.subr.bf16.mxu0 0
        %1836 = vmatpush2.bf16.msra.mxu0 0
        %1837 = vmatprep.subr.bf16.mxu0 0
        %1838 = vmatpush2.bf16.msra.mxu0 0
        %1839 = vmatprep.subr.bf16.mxu0 0
        %1840 = vmatpush2.bf16.msra.mxu0 0
        %1841 = vmatprep.subr.bf16.mxu0 0
        %1842 = vmatpush2.bf16.msra.mxu0 0
        %1843 = vmatprep.subr.bf16.mxu0 0
        %1844 = vmatpush2.bf16.msra.mxu0 0
        %1845 = vmatprep.subr.bf16.mxu0 0
        %1846 = vmatpush2.bf16.msra.mxu0 0
        %1847 = vmatprep.subr.bf16.mxu0 0
        %1848 = vmatpush2.bf16.msra.mxu0 0
        %1849 = vmatprep.subr.bf16.mxu0 %v1423
        %1850 = vmatpush2.bf16.msra.mxu0 %v1422
        %1851 = vmatprep.mubr.bf16.mxu0 %v1602
        %1852 = vmatmul.mubr.bf16.gmra.mxu0 %v461
        %v1853 = vpop.f32.mrf.mxu0
        %v1854 = vadd.f32 %v1811, %v1853
        %v1855 = vpop.f32.mrf.mxu0
        %v1856 = vadd.f32 %v1813, %v1855
        %v1857 = vpop.f32.mrf.mxu0
        %v1858 = vadd.f32 %v1815, %v1857
        %v1859 = vpop.f32.mrf.mxu0
        %v1860 = vadd.f32 %v1817, %v1859
        %1861 = vdwg.mxu0
        %1862 = vmatprep.subr.bf16.mxu0 0
        %1863 = vmatpush1.bf16.msra.mxu0 %v1305
        %1864 = vmatprep.subr.bf16.mxu0 0
        %1865 = vmatpush1.bf16.msra.mxu0 %v1298
        %1866 = vmatprep.subr.bf16.mxu0 0
        %1867 = vmatpush1.bf16.msra.mxu0 %v1291
        %1868 = vmatprep.subr.bf16.mxu0 0
        %1869 = vmatpush1.bf16.msra.mxu0 %v1284
        %1870 = vmatprep.subr.bf16.mxu0 0
        %1871 = vmatpush1.bf16.msra.mxu0 %v1277
        %1872 = vmatprep.subr.bf16.mxu0 0
        %1873 = vmatpush1.bf16.msra.mxu0 %v1270
        %1874 = vmatprep.subr.bf16.mxu0 0
        %1875 = vmatpush1.bf16.msra.mxu0 %v1263
        %1876 = vmatprep.subr.bf16.mxu0 0
        %1877 = vmatpush1.bf16.msra.mxu0 %v1256
        %1878 = vmatprep.subr.bf16.mxu0 0
        %1879 = vmatpush2.bf16.msra.mxu0 %v1361
        %1880 = vmatprep.subr.bf16.mxu0 0
        %1881 = vmatpush2.bf16.msra.mxu0 %v1354
        %1882 = vmatprep.subr.bf16.mxu0 0
        %1883 = vmatpush2.bf16.msra.mxu0 %v1347
        %1884 = vmatprep.subr.bf16.mxu0 0
        %1885 = vmatpush2.bf16.msra.mxu0 %v1340
        %1886 = vmatprep.subr.bf16.mxu0 0
        %1887 = vmatpush2.bf16.msra.mxu0 %v1333
        %1888 = vmatprep.subr.bf16.mxu0 0
        %1889 = vmatpush2.bf16.msra.mxu0 %v1326
        %1890 = vmatprep.subr.bf16.mxu0 0
        %1891 = vmatpush2.bf16.msra.mxu0 %v1319
        %1892 = vmatprep.subr.bf16.mxu0 0
        %1893 = vmatpush2.bf16.msra.mxu0 %v1312
        %1894 = vmatprep.mubr.bf16.mxu0 %v460
        %1895 = vmatmul.mubr.bf16.gmra.mxu0 %v459
        %v1896 = vpop.f32.mrf.mxu0
        %v1897 = vadd.f32 %v692, %v1896
        %v1898 = vpop.f32.mrf.mxu0
        %v1899 = vpop.f32.mrf.mxu0
        %v1900 = vadd.f32 %v692, %v1899
        %v1901 = vpop.f32.mrf.mxu0
        %1902 = vdwg.mxu0
        %1903 = vmatprep.subr.bf16.mxu0 0
        %1904 = vmatpush1.bf16.msra.mxu0 %v1417
        %1905 = vmatprep.subr.bf16.mxu0 0
        %1906 = vmatpush1.bf16.msra.mxu0 %v1410
        %1907 = vmatprep.subr.bf16.mxu0 0
        %1908 = vmatpush1.bf16.msra.mxu0 %v1403
        %1909 = vmatprep.subr.bf16.mxu0 0
        %1910 = vmatpush1.bf16.msra.mxu0 %v1396
        %1911 = vmatprep.subr.bf16.mxu0 0
        %1912 = vmatpush1.bf16.msra.mxu0 %v1389
        %1913 = vmatprep.subr.bf16.mxu0 0
        %1914 = vmatpush1.bf16.msra.mxu0 %v1382
        %1915 = vmatprep.subr.bf16.mxu0 0
        %1916 = vmatpush1.bf16.msra.mxu0 %v1375
        %1917 = vmatprep.subr.bf16.mxu0 0
        %1918 = vmatpush1.bf16.msra.mxu0 %v1368
        %1919 = vmatprep.subr.bf16.mxu0 0
        %1920 = vmatpush2.bf16.msra.mxu0 0
        %1921 = vmatprep.subr.bf16.mxu0 0
        %1922 = vmatpush2.bf16.msra.mxu0 0
        %1923 = vmatprep.subr.bf16.mxu0 0
        %1924 = vmatpush2.bf16.msra.mxu0 0
        %1925 = vmatprep.subr.bf16.mxu0 0
        %1926 = vmatpush2.bf16.msra.mxu0 0
        %1927 = vmatprep.subr.bf16.mxu0 0
        %1928 = vmatpush2.bf16.msra.mxu0 0
        %1929 = vmatprep.subr.bf16.mxu0 0
        %1930 = vmatpush2.bf16.msra.mxu0 0
        %1931 = vmatprep.subr.bf16.mxu0 0
        %1932 = vmatpush2.bf16.msra.mxu0 0
        %1933 = vmatprep.subr.bf16.mxu0 0
        %1934 = vmatpush2.bf16.msra.mxu0 %v1424
        %1935 = vmatprep.mubr.bf16.mxu0 %v1602
        %1936 = vmatmul.mubr.bf16.gmra.mxu0 %v461
        %v1937 = vpop.f32.mrf.mxu0
        %v1938 = vadd.f32 %v1897, %v1937
        %v1939 = vpop.f32.mrf.mxu0
        %v1940 = vpop.f32.mrf.mxu0
        %v1941 = vadd.f32 %v1900, %v1940
        %v1942 = vpop.f32.mrf.mxu0
        %1943 = vdwg.mxu0
        %v1944 = vmul.f32 %v1682, 0.5
        %v1945 = vmul.f32 %v1684, 0.5
        %v1946 = vmul.f32 %v1768, 0.5
        %v1947 = vmul.f32 %v1770, 0.5
        %v1948 = vmul.f32 %v1854, 0.5
        %v1949 = vmul.f32 %v1856, 0.5
        %v1950 = vmul.f32 %v1938, 0.5
        %v1951 = vmul.f32 %v1686, 0.5
        %v1952 = vmul.f32 %v1688, 0.5
        %v1953 = vmul.f32 %v1772, 0.5
        %v1954 = vmul.f32 %v1774, 0.5
        %v1955 = vmul.f32 %v1858, 0.5
        %v1956 = vmul.f32 %v1860, 0.5
        %v1957 = vmul.f32 %v1941, 0.5
        %v1958 = vtanh.pop %v1944
        %v1959 = vtanh.pop %v1945
        %v1960 = vtanh.pop %v1946
        %v1961 = vtanh.pop %v1947
        %v1962 = vtanh.pop %v1948
        %v1963 = vtanh.pop %v1949
        %v1964 = vtanh.pop %v1950
        %v1965 = vtanh.pop %v1951
        %v1966 = vtanh.pop %v1952
        %v1967 = vtanh.pop %v1953
        %v1968 = vtanh.pop %v1954
        %v1969 = vtanh.pop %v1955
        %v1970 = vtanh.pop %v1956
        %v1971 = vtanh.pop %v1957
        %v1972 = vadd.f32 %v1958, 1.0
        %v1973 = vadd.f32 %v1959, 1.0
        %v1974 = vadd.f32 %v1960, 1.0
        %v1975 = vadd.f32 %v1961, 1.0
        %v1976 = vadd.f32 %v1962, 1.0
        %v1977 = vadd.f32 %v1963, 1.0
        %v1978 = vadd.f32 %v1964, 1.0
        %v1979 = vadd.f32 %v1965, 1.0
        %v1980 = vadd.f32 %v1966, 1.0
        %v1981 = vadd.f32 %v1967, 1.0
        %v1982 = vadd.f32 %v1968, 1.0
        %v1983 = vadd.f32 %v1969, 1.0
        %v1984 = vadd.f32 %v1970, 1.0
        %v1985 = vadd.f32 %v1971, 1.0
        %v1986 = vmul.f32 %v1972, 0.5
        %v1987 = vmul.f32 %v1973, 0.5
        %v1988 = vmul.f32 %v1974, 0.5
        %v1989 = vmul.f32 %v1975, 0.5
        %v1990 = vmul.f32 %v1976, 0.5
        %v1991 = vmul.f32 %v1977, 0.5
        %v1992 = vmul.f32 %v1978, 0.5
        %v1993 = vmul.f32 %v1979, 0.5
        %v1994 = vmul.f32 %v1980, 0.5
        %v1995 = vmul.f32 %v1981, 0.5
        %v1996 = vmul.f32 %v1982, 0.5
        %v1997 = vmul.f32 %v1983, 0.5
        %v1998 = vmul.f32 %v1984, 0.5
        %v1999 = vmul.f32 %v1985, 0.5
        %v2000 = vpack.c.bf16 %v1993, %v1986
        %v2001 = vpack.c.bf16 %v1994, %v1987
        %v2002 = vpack.c.bf16 %v1995, %v1988
        %v2003 = vpack.c.bf16 %v1996, %v1989
        %v2004 = vpack.c.bf16 %v1997, %v1990
        %v2005 = vpack.c.bf16 %v1998, %v1991
        %v2006 = vpack.c.bf16 %v1999, %v1992
        %v2014 = vunpack.c.l.b16 %v2000
        %v2015 = vunpack.c.l.b16 %v2001
        %v2016 = vunpack.c.l.b16 %v2002
        %v2017 = vunpack.c.l.b16 %v2003
        %v2018 = vunpack.c.l.b16 %v2004
        %v2019 = vunpack.c.l.b16 %v2005
        %v2020 = vunpack.c.l.b16 %v2006
        %v2021 = vunpack.c.h.b16 %v2000
        %v2022 = vunpack.c.h.b16 %v2001
        %v2023 = vunpack.c.h.b16 %v2002
        %v2024 = vunpack.c.h.b16 %v2003
        %v2025 = vunpack.c.h.b16 %v2004
        %v2026 = vunpack.c.h.b16 %v2005
        %v2027 = vunpack.c.h.b16 %v2006
        %v2028 = vpack.c.b16 %v2015, %v2014
        %v2029 = vpack.c.b16 %v2017, %v2016
        %v2030 = vpack.c.b16 %v2019, %v2018
        %v2031 = vpack.c.b16 %v2020, %v2020
        %v2032 = vpack.c.b16 %v2022, %v2021
        %v2033 = vpack.c.b16 %v2024, %v2023
        %v2034 = vpack.c.b16 %v2026, %v2025
        %v2035 = vpack.c.b16 %v2027, %v2027
        %2044 = vst [vmem:[%s284] sm:$0xff] %v2028
        %2045 = vst [vmem:[%s284 + $0x8] sm:$0xff] %v2029
        %2046 = vst [vmem:[%s284 + $0x10] sm:$0xff] %v2030
        %vm2047 = vcmask 125952
        %2048 = vst.msk [vmem:[%s284 + $0x18] sm:$0xf] %vm2047, %v2031
        %2049 = vst [vmem:[%s284 + $0x1c] sm:$0xff] %v2032
        %2050 = vst [vmem:[%s284 + $0x24] sm:$0xff] %v2033
        %2051 = vst [vmem:[%s284 + $0x2c] sm:$0xff] %v2034
        %2052 = vst.msk [vmem:[%s284 + $0x34] sm:$0xf] %vm2047, %v2035
        %s2053 = sand.u32 %s142, 1
        %s2054 = scalar_lea.sflag [#allocation4], %s2053
        %s2055 = sand.u32 %s142, 1
        %s2056 = smul.addr %s2055, 56
        %s2057 = scalar_lea.vmem [#allocation10], %s2056
        // Predicated region
        $region57: #{tpu_custom_call.1} parent=39 // pred_check
          %p2058 = pneg %p152
        $region58: #{tpu_custom_call.1} parent=39 // pred_check_branch
          %2060 = sbr.rel (%p2058) target = $region60
        $region59: #{tpu_custom_call.1} parent=39 // pred_region
          %s2061 = smul.u32 2, %s24
          %s2063 = ssub.s32 896, 896
          %2064 = vsyncadd %s2054, %s2063
          %s2065 = smul.addr %s2061, 7
          %s2066 = smul.addr %s2065, 64
          %s2067 = scalar_lea.hbm %s5, %s2066
          %s2068 = sshll.u32 %s2057, 4
          %s2069 = int_to_ptr.vmem [resolvable:$true] %s2068
          %2074 = dma.vmem_to_hbm [thread:$0]  %s2069, 896, %s2067, %s2054, 448, 448, 28
        $region60: #{tpu_custom_call.1} parent=39 // pred_fallthru
          _
      $region40: #{tpu_custom_call.1} parent=5 // pred_fallthru
        _
      %p2075 = scmp.le.s32.totalorder 2, %s19
      // Predicated region
      $region61: #{tpu_custom_call.1} parent=5 // pred_check
        %p2076 = pneg %p2075
      $region62: #{tpu_custom_call.1} parent=5 // pred_check_branch
        %2078 = sbr.rel (%p2076) target = $region64
      $region63: #{tpu_custom_call.1} parent=5 // pred_region
        %s2079 = ssub.s32 %s19, 2
        // Predicated region
        $region65: #{tpu_custom_call.1} parent=63 // pred_check
          %p2080 = pneg %p158
        $region66: #{tpu_custom_call.1} parent=63 // pred_check_branch
          %2082 = sbr.rel (%p2080) target = $region68
        $region67: #{tpu_custom_call.1} parent=63 // pred_region
          %s2083 = sand.u32 %s143, 1
          %s2084 = scalar_lea.sflag [#allocation4], %s2083
          %s2085 = sand.u32 %s143, 1
          %s2086 = smul.addr %s2085, 56
          %s2087 = scalar_lea.vmem [#allocation10], %s2086
          %2088 = dma.done %s2084, 896
        $region68: #{tpu_custom_call.1} parent=63 // pred_fallthru
          _
      $region64: #{tpu_custom_call.1} parent=5 // pred_fallthru
        _
    $region6: #{tpu_custom_call.1} parent=1 // loop_footer
      %s23 = sadd.s32 1, %s19
    $region7: #{tpu_custom_call.1} parent=1 // loop_footer_branch
      %18 = sbr.rel target = $region3
    $region8: #{tpu_custom_call.1} parent=1 // loop_exit
      _
    %2089 = vsyncpa [#allocation3], 1
    %s2090 = scalar_lea.sflag [#allocation3], 1
    %2091 = vsyncpa %s2090, 1
    %2092 = vsyncpa [#allocation6], 1
    %2093 = vsyncpa [#allocation9], 1
    %2094 = vsyncpa [#allocation4], 1
    %s2095 = scalar_lea.sflag [#allocation4], 1
    %2096 = vsyncpa %s2095, 1

</llo_original>
